<compile_context>
chip_gen: v5e
topology: v5e:2x2
jax: 0.10.0
libtpu: 0.0.40
codegen_flags: <defaults>
</compile_context>

<pallas_src>
import functools
import itertools

import jax
import jax.numpy as jnp
import numpy as np
from jax import lax
from jax.experimental import pallas as pl
from jax.experimental.pallas import tpu as pltpu

EPS = 1e-8


def _round_up(x, m):
    return ((x + m - 1) // m) * m


# ---------------------------------------------------------------------------
# Pallas kernel: pairwise negative SI-SDR, time-tiled reduction.
# ---------------------------------------------------------------------------
def _pairwise_neg_sisdr_kernel(est_ref, tgt_ref, out_ref,
                               dot_acc, se_acc, st_acc, se2_acc, st2_acc,
                               *, true_T):
    """One time-tile of the pairwise neg-SI-SDR reduction.

    Accumulates sum(e*t) (MXU), sum(e), sum(t), sum(e^2), sum(t^2) across the
    time grid axis; the closed-form SI-SDR matrix is produced on the last step.
    """
    k = pl.program_id(0)

    @pl.when(k == 0)
    def _init():
        dot_acc[...] = jnp.zeros_like(dot_acc)
        se_acc[...] = jnp.zeros_like(se_acc)
        st_acc[...] = jnp.zeros_like(st_acc)
        se2_acc[...] = jnp.zeros_like(se2_acc)
        st2_acc[...] = jnp.zeros_like(st2_acc)

    est = est_ref[...]                      # (E, tT), native dtype (f32/bf16)
    tgt = tgt_ref[...]                      # (G, tT)

    # O(E*G*T) contraction on the MXU, f32 accumulation.
    dot_acc[...] += lax.dot_general(
        est, tgt, (((1,), (1,)), ((), ())),
        preferred_element_type=jnp.float32)                     # (E, G)

    # Per-row moments on the VPU/XLU: O((E+G)*T) only.
    est_f = est.astype(jnp.float32)
    tgt_f = tgt.astype(jnp.float32)
    se_acc[...] += jnp.sum(est_f, axis=-1, keepdims=True)       # (E, 1)
    st_acc[...] += jnp.sum(tgt_f, axis=-1, keepdims=True)       # (G, 1)
    se2_acc[...] += jnp.sum(est_f * est_f, axis=-1, keepdims=True)
    st2_acc[...] += jnp.sum(tgt_f * tgt_f, axis=-1, keepdims=True)

    @pl.when(k == pl.num_programs(0) - 1)
    def _finalize():
        inv_T = jnp.float32(1.0 / true_T)
        sum_e = se_acc[...]                                      # (E, 1)
        sum_t = st_acc[...]                                      # (G, 1)
        # Zero-mean identities (single pass, zero padding is harmless):
        #   sum((e-ē)(t-t̄)) = sum(et) - sum(e)sum(t)/T, etc.
        dot = dot_acc[...] - (sum_e * sum_t.T) * inv_T           # (E, G)
        e_energy = se2_acc[...] - sum_e * sum_e * inv_T          # (E, 1)
        t_energy = st2_acc[...] - sum_t * sum_t * inv_T          # (G, 1)
        t_energy = jnp.maximum(t_energy, 0.0) + EPS
        proj2 = (dot * dot) / t_energy.T                         # ||proj||^2
        # Clamp: rounding can make the closed-form noise energy slightly < 0.
        noise2 = jnp.maximum(e_energy - proj2, 0.0) + EPS        # ||e-proj||^2
        sdr = proj2 / noise2
        out_ref[...] = (-10.0 * jnp.log10(sdr + EPS)).astype(out_ref.dtype)


def pairwise_neg_sisdr(est_targets, targets, *, time_tile=32768):
    """Pallas pairwise neg SI-SDR: est (E, T), tgt (G, T) -> (E, G) f32."""
    E, T = est_targets.shape
    G, T2 = targets.shape
    if T != T2:
        raise ValueError("time axes must match")

    # Tile the time axis so HBM reads pipeline (double-buffered per tile).
    # Pad to a multiple of the tile with zeros: zeros do not perturb any of
    # the accumulated sums, and the true T is used in the mean corrections.
    tT = min(int(time_tile), _round_up(T, 128))
    tT = _round_up(tT, 128)
    T_pad = _round_up(T, tT)
    if T_pad != T:
        est_targets = jnp.pad(est_targets, ((0, 0), (0, T_pad - T)))
        targets = jnp.pad(targets, ((0, 0), (0, T_pad - T)))
    num_t = T_pad // tT

    kernel = functools.partial(_pairwise_neg_sisdr_kernel, true_T=T)

    # NOTE: for batched evaluation on v7x, vmap this call (or add a leading
    # "parallel" batch grid axis) to use both TensorCores.
    return pl.pallas_call(
        kernel,
        out_shape=jax.ShapeDtypeStruct((E, G), jnp.float32),
        grid_spec=pltpu.PrefetchScalarGridSpec(
            num_scalar_prefetch=0,
            grid=(num_t,),
            in_specs=[
                pl.BlockSpec((E, tT), lambda k: (0, k)),
                pl.BlockSpec((G, tT), lambda k: (0, k)),
            ],
            out_specs=pl.BlockSpec((E, G), lambda k: (0, 0)),
            scratch_shapes=[
                pltpu.VMEM((E, G), jnp.float32),   # sum(e*t)
                pltpu.VMEM((E, 1), jnp.float32),   # sum(e)
                pltpu.VMEM((G, 1), jnp.float32),   # sum(t)
                pltpu.VMEM((E, 1), jnp.float32),   # sum(e^2)
                pltpu.VMEM((G, 1), jnp.float32),   # sum(t^2)
            ],
        ),
        compiler_params=pltpu.CompilerParams(
            dimension_semantics=("arbitrary",),
            vmem_limit_bytes=32 * 1024 * 1024,     # explicit; fits v7x budget
        ),
    )(est_targets, targets)


def _pure_jax_pairwise_neg_sisdr(est, tgt):
    """Reference (broadcast form, no Pallas) used only for a sanity check."""
    est = est.astype(jnp.float32) - jnp.mean(est, axis=-1, keepdims=True)
    tgt = tgt.astype(jnp.float32) - jnp.mean(tgt, axis=-1, keepdims=True)
    s_t = tgt[None, :, :]
    s_e = est[:, None, :]
    dot = jnp.sum(s_e * s_t, axis=-1, keepdims=True)
    energy = jnp.sum(s_t * s_t, axis=-1, keepdims=True) + EPS
    proj = dot * s_t / energy
    noise = s_e - proj
    sdr = jnp.sum(proj * proj, -1) / (jnp.sum(noise * noise, -1) + EPS)
    return -10.0 * jnp.log10(sdr + EPS)


# ---------------------------------------------------------------------------
# Penalized PIT wrapper (P-SI-SNR).
# ---------------------------------------------------------------------------
@functools.lru_cache(maxsize=None)
def _assignment_tables(n_rows, n_cols):
    """Constant enumeration of all injective assignments for a (R, C) cost."""
    if n_rows <= n_cols:
        perms = np.asarray(list(itertools.permutations(range(n_cols), n_rows)),
                           dtype=np.int32)                       # (P, R)
        fixed = np.arange(n_rows, dtype=np.int32)
        rows_are_fixed = True
    else:
        perms = np.asarray(list(itertools.permutations(range(n_rows), n_cols)),
                           dtype=np.int32)                       # (P, C)
        fixed = np.arange(n_cols, dtype=np.int32)
        rows_are_fixed = False
    return jnp.asarray(perms), jnp.asarray(fixed), rows_are_fixed


class PenalizedPITWrapper:
    """JAX/Pallas port of Penalized_PIT_Wrapper (P-SI-SNR)."""

    def __init__(self, loss_func, penalty=30, perm_reduce=None):
        assert penalty > 0, "penalty term should be positive"
        self.neg_penalty = -penalty
        self.perm_reduce = perm_reduce  # unused (None in the reference usage)
        self.loss_func = loss_func

    def __call__(self, est_targets, targets):
        est_nsrc, _T = est_targets.shape
        # NOTE: the reference code also takes gt_nsrc from est_targets.size(0);
        # we reproduce that quirk exactly (penalty term is therefore 0).
        gt_nsrc = est_targets.shape[0]

        pw_losses = self.loss_func(est_targets, targets)     # (est_nsrc, tgt_nsrc)
        pwl = pw_losses.T                                     # (tgt_nsrc, est_nsrc)
        R, C = pwl.shape
        k = min(R, C)

        # linear_sum_assignment on the tiny cost matrix via exhaustive
        # enumeration, fully on device: one gather + sum + min.
        # TODO(synk): a true Hungarian algorithm has no clean Pallas
        # equivalent; brute force is exact for the small source counts here.
        perms, fixed, rows_are_fixed = _assignment_tables(R, C)
        if rows_are_fixed:
            costs = pwl[fixed[None, :], perms].sum(axis=-1)   # (P,)
        else:
            costs = pwl[perms, fixed[None, :]].sum(axis=-1)   # (P,)
        avg_neg_sdr = jnp.min(costs) / k                      # mean over assigned pairs

        p_si_snr = (-avg_neg_sdr * min(est_nsrc, gt_nsrc)
                    + self.neg_penalty * abs(est_nsrc - gt_nsrc)) / max(est_nsrc, gt_nsrc)
        return p_si_snr


if __name__ == "__main__":
    key = jax.random.PRNGKey(0)
    k1, k2 = jax.random.split(key)

    est_nsrc, gt_nsrc, T = 3, 4, 16000            # ~2 s @ 8 kHz (wsj0-mix style)
    tgt = jax.random.normal(k1, (gt_nsrc, T), dtype=jnp.float32)
    noise = jax.random.normal(k2, (est_nsrc, T), dtype=jnp.float32)
    # Estimates = noisy copies of the first est_nsrc targets (realistic SI-SDR).
    est = tgt[:est_nsrc] + 0.5 * noise

    # Sanity check: tiled Pallas pairwise loss matrix matches the pure-JAX
    # broadcast reference.  Small tile so the reduction grid has several steps
    # and the time-padding path is exercised (16000 -> 4 x 4096).
    pw_kernel = jax.block_until_ready(pairwise_neg_sisdr(est, tgt, time_tile=4096))
    pw_ref = jax.block_until_ready(_pure_jax_pairwise_neg_sisdr(est, tgt))
    np.testing.assert_allclose(np.asarray(pw_kernel), np.asarray(pw_ref),
                               rtol=5e-3, atol=1e-3)

    loss = PenalizedPITWrapper(pairwise_neg_sisdr, penalty=30)
    p_si_snr = jax.block_until_ready(loss(est, tgt))
    assert np.isfinite(float(p_si_snr))

    print("KERNEL_OK")
</pallas_src>

<mosaic_0001>
module attributes {stable_mosaic.version = 11 : i64} {
  func.func @_pairwise_neg_sisdr_kernel(%arg0: i32, %arg1: memref<3x4096xf32, #tpu.memory_space<vmem>>, %arg2: memref<4x4096xf32, #tpu.memory_space<vmem>>, %arg3: memref<3x4xf32, #tpu.memory_space<vmem>>, %arg4: memref<3x4xf32, #tpu.memory_space<vmem>>, %arg5: memref<3x1xf32, #tpu.memory_space<vmem>>, %arg6: memref<4x1xf32, #tpu.memory_space<vmem>>, %arg7: memref<3x1xf32, #tpu.memory_space<vmem>>, %arg8: memref<4x1xf32, #tpu.memory_space<vmem>>) attributes {dimension_semantics = [#tpu.dimension_semantics<arbitrary>], iteration_bounds = array<i64: 4>, scalar_prefetch = 0 : i64, scratch_operands = 5 : i64, tpu.core_type = #tpu.core_type<tc>, window_params = [{transform_indices = @transform_0, window_bounds = array<i64: 3, 4096>}, {transform_indices = @transform_1, window_bounds = array<i64: 4, 4096>}, {pipeline_mode = #tpu.pipeline_mode<synchronous>, transform_indices = @transform_2, window_bounds = array<i64: 3, 4>}]} {
    %c0_i32 = arith.constant 0 : i32
    %0 = arith.cmpi eq, %arg0, %c0_i32 : i32
    %1 = arith.extui %0 : i1 to i32
    %c0_i32_0 = arith.constant 0 : i32
    %2 = arith.cmpi ne, %1, %c0_i32_0 : i32
    scf.if %2 {
      %cst_29 = arith.constant 0.000000e+00 : f32
      %34 = vector.broadcast %cst_29 : f32 to vector<3x4xf32>
      %c0_30 = arith.constant 0 : index
      %c0_31 = arith.constant 0 : index
      %35 = vector.load %arg4[%c0_30, %c0_31] : memref<3x4xf32, #tpu.memory_space<vmem>>, vector<3x4xf32>
      tpu.vector_store %arg4[%c0_30, %c0_31], %34 {strides = array<i32>} : memref<3x4xf32, #tpu.memory_space<vmem>>, vector<3x4xf32>,
      %cst_32 = arith.constant 0.000000e+00 : f32
      %36 = vector.broadcast %cst_32 : f32 to vector<3x1xf32>
      %c0_33 = arith.constant 0 : index
      %c0_34 = arith.constant 0 : index
      %37 = vector.load %arg5[%c0_33, %c0_34] : memref<3x1xf32, #tpu.memory_space<vmem>>, vector<3x1xf32>
      tpu.vector_store %arg5[%c0_33, %c0_34], %36 {strides = array<i32>} : memref<3x1xf32, #tpu.memory_space<vmem>>, vector<3x1xf32>,
      %cst_35 = arith.constant 0.000000e+00 : f32
      %38 = vector.broadcast %cst_35 : f32 to vector<4x1xf32>
      %c0_36 = arith.constant 0 : index
      %c0_37 = arith.constant 0 : index
      %39 = vector.load %arg6[%c0_36, %c0_37] : memref<4x1xf32, #tpu.memory_space<vmem>>, vector<4x1xf32>
      tpu.vector_store %arg6[%c0_36, %c0_37], %38 {strides = array<i32>} : memref<4x1xf32, #tpu.memory_space<vmem>>, vector<4x1xf32>,
      %cst_38 = arith.constant 0.000000e+00 : f32
      %40 = vector.broadcast %cst_38 : f32 to vector<3x1xf32>
      %c0_39 = arith.constant 0 : index
      %c0_40 = arith.constant 0 : index
      %41 = vector.load %arg7[%c0_39, %c0_40] : memref<3x1xf32, #tpu.memory_space<vmem>>, vector<3x1xf32>
      tpu.vector_store %arg7[%c0_39, %c0_40], %40 {strides = array<i32>} : memref<3x1xf32, #tpu.memory_space<vmem>>, vector<3x1xf32>,
      %cst_41 = arith.constant 0.000000e+00 : f32
      %42 = vector.broadcast %cst_41 : f32 to vector<4x1xf32>
      %c0_42 = arith.constant 0 : index
      %c0_43 = arith.constant 0 : index
      %43 = vector.load %arg8[%c0_42, %c0_43] : memref<4x1xf32, #tpu.memory_space<vmem>>, vector<4x1xf32>
      tpu.vector_store %arg8[%c0_42, %c0_43], %42 {strides = array<i32>} : memref<4x1xf32, #tpu.memory_space<vmem>>, vector<4x1xf32>,
    } else {
    }
    %c0 = arith.constant 0 : index
    %c0_1 = arith.constant 0 : index
    %3 = vector.load %arg1[%c0, %c0_1] : memref<3x4096xf32, #tpu.memory_space<vmem>>, vector<3x4096xf32>
    %c0_2 = arith.constant 0 : index
    %c0_3 = arith.constant 0 : index
    %4 = vector.load %arg2[%c0_2, %c0_3] : memref<4x4096xf32, #tpu.memory_space<vmem>>, vector<4x4096xf32>
    %c0_4 = arith.constant 0 : index
    %c0_5 = arith.constant 0 : index
    %5 = vector.load %arg4[%c0_4, %c0_5] : memref<3x4xf32, #tpu.memory_space<vmem>>, vector<3x4xf32>
    %cst = arith.constant dense<0.000000e+00> : vector<3x4xf32>
    %6 = tpu.matmul %3, %4, %cst {dimension_numbers = #tpu.dot_dimension_numbers<[1], [1], [0], [0], [0, 0, 1, 0], [], []>} : vector<3x4096xf32>, vector<4x4096xf32>, vector<3x4xf32> -> vector<3x4xf32>
    %7 = arith.addf %5, %6 : vector<3x4xf32>
    %c0_6 = arith.constant 0 : index
    %c0_7 = arith.constant 0 : index
    %8 = vector.load %arg4[%c0_6, %c0_7] : memref<3x4xf32, #tpu.memory_space<vmem>>, vector<3x4xf32>
    tpu.vector_store %arg4[%c0_6, %c0_7], %7 {strides = array<i32>} : memref<3x4xf32, #tpu.memory_space<vmem>>, vector<3x4xf32>,
    %c0_8 = arith.constant 0 : index
    %c0_9 = arith.constant 0 : index
    %9 = vector.load %arg5[%c0_8, %c0_9] : memref<3x1xf32, #tpu.memory_space<vmem>>, vector<3x1xf32>
    %cst_10 = arith.constant dense<0.000000e+00> : vector<3xf32>
    %10 = vector.multi_reduction <add>, %3, %cst_10 [1] : vector<3x4096xf32> to vector<3xf32>
    %11 = vector.shape_cast %10 : vector<3xf32> to vector<3x1xf32>
    %12 = arith.addf %9, %11 : vector<3x1xf32>
    %c0_11 = arith.constant 0 : index
    %c0_12 = arith.constant 0 : index
    %13 = vector.load %arg5[%c0_11, %c0_12] : memref<3x1xf32, #tpu.memory_space<vmem>>, vector<3x1xf32>
    tpu.vector_store %arg5[%c0_11, %c0_12], %12 {strides = array<i32>} : memref<3x1xf32, #tpu.memory_space<vmem>>, vector<3x1xf32>,
    %c0_13 = arith.constant 0 : index
    %c0_14 = arith.constant 0 : index
    %14 = vector.load %arg6[%c0_13, %c0_14] : memref<4x1xf32, #tpu.memory_space<vmem>>, vector<4x1xf32>
    %cst_15 = arith.constant dense<0.000000e+00> : vector<4xf32>
    %15 = vector.multi_reduction <add>, %4, %cst_15 [1] : vector<4x4096xf32> to vector<4xf32>
    %16 = vector.shape_cast %15 : vector<4xf32> to vector<4x1xf32>
    %17 = arith.addf %14, %16 : vector<4x1xf32>
    %c0_16 = arith.constant 0 : index
    %c0_17 = arith.constant 0 : index
    %18 = vector.load %arg6[%c0_16, %c0_17] : memref<4x1xf32, #tpu.memory_space<vmem>>, vector<4x1xf32>
    tpu.vector_store %arg6[%c0_16, %c0_17], %17 {strides = array<i32>} : memref<4x1xf32, #tpu.memory_space<vmem>>, vector<4x1xf32>,
    %c0_18 = arith.constant 0 : index
    %c0_19 = arith.constant 0 : index
    %19 = vector.load %arg7[%c0_18, %c0_19] : memref<3x1xf32, #tpu.memory_space<vmem>>, vector<3x1xf32>
    %20 = arith.mulf %3, %3 : vector<3x4096xf32>
    %cst_20 = arith.constant dense<0.000000e+00> : vector<3xf32>
    %21 = vector.multi_reduction <add>, %20, %cst_20 [1] : vector<3x4096xf32> to vector<3xf32>
    %22 = vector.shape_cast %21 : vector<3xf32> to vector<3x1xf32>
    %23 = arith.addf %19, %22 : vector<3x1xf32>
    %c0_21 = arith.constant 0 : index
    %c0_22 = arith.constant 0 : index
    %24 = vector.load %arg7[%c0_21, %c0_22] : memref<3x1xf32, #tpu.memory_space<vmem>>, vector<3x1xf32>
    tpu.vector_store %arg7[%c0_21, %c0_22], %23 {strides = array<i32>} : memref<3x1xf32, #tpu.memory_space<vmem>>, vector<3x1xf32>,
    %c0_23 = arith.constant 0 : index
    %c0_24 = arith.constant 0 : index
    %25 = vector.load %arg8[%c0_23, %c0_24] : memref<4x1xf32, #tpu.memory_space<vmem>>, vector<4x1xf32>
    %26 = arith.mulf %4, %4 : vector<4x4096xf32>
    %cst_25 = arith.constant dense<0.000000e+00> : vector<4xf32>
    %27 = vector.multi_reduction <add>, %26, %cst_25 [1] : vector<4x4096xf32> to vector<4xf32>
    %28 = vector.shape_cast %27 : vector<4xf32> to vector<4x1xf32>
    %29 = arith.addf %25, %28 : vector<4x1xf32>
    %c0_26 = arith.constant 0 : index
    %c0_27 = arith.constant 0 : index
    %30 = vector.load %arg8[%c0_26, %c0_27] : memref<4x1xf32, #tpu.memory_space<vmem>>, vector<4x1xf32>
    tpu.vector_store %arg8[%c0_26, %c0_27], %29 {strides = array<i32>} : memref<4x1xf32, #tpu.memory_space<vmem>>, vector<4x1xf32>,
    %c3_i32 = arith.constant 3 : i32
    %31 = arith.cmpi eq, %arg0, %c3_i32 : i32
    %32 = arith.extui %31 : i1 to i32
    %c0_i32_28 = arith.constant 0 : i32
    %33 = arith.cmpi ne, %32, %c0_i32_28 : i32
    scf.if %33 {
      %c0_29 = arith.constant 0 : index
      %c0_30 = arith.constant 0 : index
      %34 = vector.load %arg5[%c0_29, %c0_30] : memref<3x1xf32, #tpu.memory_space<vmem>>, vector<3x1xf32>
      %c0_31 = arith.constant 0 : index
      %c0_32 = arith.constant 0 : index
      %35 = vector.load %arg6[%c0_31, %c0_32] : memref<4x1xf32, #tpu.memory_space<vmem>>, vector<4x1xf32>
      %c0_33 = arith.constant 0 : index
      %c0_34 = arith.constant 0 : index
      %36 = vector.load %arg4[%c0_33, %c0_34] : memref<3x4xf32, #tpu.memory_space<vmem>>, vector<3x4xf32>
      %37 = tpu.transpose %35, [1, 0] : vector<4x1xf32> -> vector<1x4xf32>
      %38 = vector.broadcast %34 : vector<3x1xf32> to vector<3x4xf32>
      %39 = vector.broadcast %37 : vector<1x4xf32> to vector<3x4xf32>
      %40 = arith.mulf %38, %39 : vector<3x4xf32>
      %cst_35 = arith.constant 6.250000e-05 : f32
      %41 = vector.broadcast %cst_35 : f32 to vector<3x4xf32>
      %42 = arith.mulf %40, %41 : vector<3x4xf32>
      %43 = arith.subf %36, %42 : vector<3x4xf32>
      %c0_36 = arith.constant 0 : index
      %c0_37 = arith.constant 0 : index
      %44 = vector.load %arg7[%c0_36, %c0_37] : memref<3x1xf32, #tpu.memory_space<vmem>>, vector<3x1xf32>
      %45 = arith.mulf %34, %34 : vector<3x1xf32>
      %cst_38 = arith.constant 6.250000e-05 : f32
      %46 = vector.broadcast %cst_38 : f32 to vector<3x1xf32>
      %47 = arith.mulf %45, %46 : vector<3x1xf32>
      %48 = arith.subf %44, %47 : vector<3x1xf32>
      %c0_39 = arith.constant 0 : index
      %c0_40 = arith.constant 0 : index
      %49 = vector.load %arg8[%c0_39, %c0_40] : memref<4x1xf32, #tpu.memory_space<vmem>>, vector<4x1xf32>
      %50 = arith.mulf %35, %35 : vector<4x1xf32>
      %cst_41 = arith.constant 6.250000e-05 : f32
      %51 = vector.broadcast %cst_41 : f32 to vector<4x1xf32>
      %52 = arith.mulf %50, %51 : vector<4x1xf32>
      %53 = arith.subf %49, %52 : vector<4x1xf32>
      %cst_42 = arith.constant 0.000000e+00 : f32
      %54 = vector.broadcast %cst_42 : f32 to vector<4x1xf32>
      %55 = arith.maximumf %53, %54 : vector<4x1xf32>
      %cst_43 = arith.constant 9.99999993E-9 : f32
      %56 = vector.broadcast %cst_43 : f32 to vector<4x1xf32>
      %57 = arith.addf %55, %56 : vector<4x1xf32>
      %58 = arith.mulf %43, %43 : vector<3x4xf32>
      %59 = tpu.transpose %57, [1, 0] : vector<4x1xf32> -> vector<1x4xf32>
      %60 = vector.broadcast %59 : vector<1x4xf32> to vector<3x4xf32>
      %61 = arith.divf %58, %60 : vector<3x4xf32>
      %62 = vector.broadcast %48 : vector<3x1xf32> to vector<3x4xf32>
      %63 = arith.subf %62, %61 : vector<3x4xf32>
      %cst_44 = arith.constant 0.000000e+00 : f32
      %64 = vector.broadcast %cst_44 : f32 to vector<3x4xf32>
      %65 = arith.maximumf %63, %64 : vector<3x4xf32>
      %cst_45 = arith.constant 9.99999993E-9 : f32
      %66 = vector.broadcast %cst_45 : f32 to vector<3x4xf32>
      %67 = arith.addf %65, %66 : vector<3x4xf32>
      %68 = arith.divf %61, %67 : vector<3x4xf32>
      %cst_46 = arith.constant 9.99999993E-9 : f32
      %69 = vector.broadcast %cst_46 : f32 to vector<3x4xf32>
      %70 = arith.addf %68, %69 : vector<3x4xf32>
      %71 = math.log %70 : vector<3x4xf32>
      %cst_47 = arith.constant 0.434294492 : f32
      %72 = vector.broadcast %cst_47 : f32 to vector<3x4xf32>
      %73 = arith.mulf %71, %72 : vector<3x4xf32>
      %cst_48 = arith.constant -1.000000e+01 : f32
      %74 = vector.broadcast %cst_48 : f32 to vector<3x4xf32>
      %75 = arith.mulf %74, %73 : vector<3x4xf32>
      %c0_49 = arith.constant 0 : index
      %c0_50 = arith.constant 0 : index
      %76 = vector.load %arg3[%c0_49, %c0_50] : memref<3x4xf32, #tpu.memory_space<vmem>>, vector<3x4xf32>
      tpu.vector_store %arg3[%c0_49, %c0_50], %75 {strides = array<i32>} : memref<3x4xf32, #tpu.memory_space<vmem>>, vector<3x4xf32>,
    } else {
    }
    return
  }
  func.func @transform_0(%arg0: i32) -> (i32, i32) {
    %c0_i32 = arith.constant 0 : i32
    %c0_i32_0 = arith.constant 0 : i32
    return %c0_i32, %arg0 : i32, i32
  }
  func.func @transform_1(%arg0: i32) -> (i32, i32) {
    %c0_i32 = arith.constant 0 : i32
    %c0_i32_0 = arith.constant 0 : i32
    return %c0_i32, %arg0 : i32, i32
  }
  func.func @transform_2(%arg0: i32) -> (i32, i32) {
    %c0_i32 = arith.constant 0 : i32
    %c0_i32_0 = arith.constant 0 : i32
    %c0_i32_1 = arith.constant 0 : i32
    return %c0_i32, %c0_i32_0 : i32, i32
  }
}

</mosaic_0001>

<llo_original>
// kernel: tpu_custom_call.1
$region0: #{tpu_custom_call.1}
  #allocation0 [shape = 'u32[]', space=smem, size = 0x4, offset = 0x4, fixed_abs, tag = 'smem constant byte address 0x4 - core index']
  #allocation1 [shape = 'u32[72,128]{1,0:T(1,128)}', space=vmem, size = 0x9000, scoped, tag = 'internal scratch']
  #allocation2 [shape = 'f32[3,4]{1,0:T(4,128)}', space=vmem, size = 0x800, scoped, tag = 'scratch operand']
  #allocation3 [shape = 'f32[3,1]{1,0:T(4,128)}', space=vmem, size = 0x800, scoped, tag = 'scratch operand']
  #allocation4 [shape = 'f32[4,1]{1,0:T(4,128)}', space=vmem, size = 0x800, scoped, tag = 'scratch operand']
  #allocation5 [shape = 'f32[3,1]{1,0:T(4,128)}', space=vmem, size = 0x800, scoped, tag = 'scratch operand']
  #allocation6 [shape = 'f32[4,1]{1,0:T(4,128)}', space=vmem, size = 0x800, scoped, tag = 'scratch operand']
  %s0 = inlined_call_operand.hbm [shape: f32[3,16384], index: 0, kind: input, shape index: {}]
  %s1 = inlined_call_operand.hbm [shape: f32[4,16384], index: 1, kind: input, shape index: {}]
  %s2 = inlined_call_operand.hbm [shape: f32[3,4], index: 2, kind: output, shape index: {}]
  %s3 = sld [smem:[#allocation0]]
  $region57: #{tpu_custom_call.1} parent=0
    _
  %s5 = ssub.s32 1, %s3
  %s6 = scalar_select 0, %s5, %s3
  $region1: #{tpu_custom_call.1} parent=0
    #allocation7 [shape = 'u8[131072]{0}', space=vmem, size = 0x20000, scoped, tag = 'input window, operand 0']
    #allocation8 [shape = 's32[2]{0}', space=sflag, size = 0x8, scoped, tag = 'scoped memory for tpu_custom_call.1']
    #allocation9 [shape = 's32[2]{0}', space=sflag, size = 0x8, scoped, tag = 'scoped memory for tpu_custom_call.1']
    #allocation10 [shape = 'u8[131072]{0}', space=vmem, size = 0x20000, scoped, tag = 'input window, operand 1']
    #allocation11 [shape = 's32[2]{0}', space=sflag, size = 0x8, scoped, tag = 'scoped memory for tpu_custom_call.1']
    #allocation12 [shape = 'u8[2048]{0}', space=vmem, size = 0x800, scoped, tag = 'output window, operand 0, single buffered']
    %7 = vsyncpa [#allocation8], 0
    %s8 = scalar_lea.sflag [#allocation8], 1
    %9 = vsyncpa %s8, 0
    %10 = vsyncpa [#allocation11], 0
    %s11 = scalar_lea.sflag [#allocation11], 1
    %12 = vsyncpa %s11, 0
    %13 = vsyncpa [#allocation9], 0
    loop: start=0, step=1, limit=6
    $region2: #{tpu_custom_call.1} parent=1 // loop_pre_header
      _
    $region3: #{tpu_custom_call.1} parent=1 // loop_header
      %s15 = sphi 0, %s19
      %p16 = scmp.ge.s32.totalorder %s15, 6
      %s25 = sphi 0, %s27
      %s28 = sphi 0, %s25
      %s29 = sphi 0, %s28
      %s45 = sphi 0, %s29
      %s51 = sphi 0, %s53
      %s54 = sphi 0, %s51
      %s55 = sphi 0, %s54
      %s71 = sphi 0, %s55
      %s75 = sphi 0, %s75
      %s77 = sphi 0, %s75
      %s78 = sphi 0, %s77
      %s92 = sphi 0, %s78
    $region4: #{tpu_custom_call.1} parent=1 // loop_header_branch
      %18 = sbr.rel (%p16) target = $region8
    $region5: #{tpu_custom_call.1} parent=1 // loop_body
      %s20 = ssub.s32 %s15, 1
      %s21 = ssub.s32 %s15, 2
      %s22 = sadd.s32 %s15, 1
      %s23 = ssub.s32 %s15, %s22
      %p24 = scmp.eq.s32.totalorder %s23, 0
      %s26 = sadd.s32 %s25, 1
      %s27 = scalar_select %p24, %s25, %s26
      %p30 = pneg %p24
      %p31 = scmp.eq.s32.totalorder %s15, 3
      %p32 = por %p30, %p31
      %p33 = scmp.ne.s32.totalorder %s25, %s28
      %p34 = scmp.eq.s32.totalorder %s15, 0
      %p35 = por %p33, %p34
      %p36 = scmp.ne.s32.totalorder %s25, %s28
      %p37 = scmp.eq.s32.totalorder %s20, 3
      %p38 = por %p36, %p37
      %p39 = scmp.ne.s32.totalorder %s28, %s29
      %p40 = scmp.eq.s32.totalorder %s20, 0
      %p41 = por %p39, %p40
      %p42 = scmp.ne.s32.totalorder %s28, %s29
      %p43 = scmp.eq.s32.totalorder %s21, 3
      %p44 = por %p42, %p43
      %p46 = scmp.ne.s32.totalorder %s29, %s45
      %p47 = scmp.eq.s32.totalorder %s21, 0
      %p48 = por %p46, %p47
      %s49 = ssub.s32 %s15, %s22
      %p50 = scmp.eq.s32.totalorder %s49, 0
      %s52 = sadd.s32 %s51, 1
      %s53 = scalar_select %p50, %s51, %s52
      %p56 = pneg %p50
      %p57 = scmp.eq.s32.totalorder %s15, 3
      %p58 = por %p56, %p57
      %p59 = scmp.ne.s32.totalorder %s51, %s54
      %p60 = scmp.eq.s32.totalorder %s15, 0
      %p61 = por %p59, %p60
      %p62 = scmp.ne.s32.totalorder %s51, %s54
      %p63 = scmp.eq.s32.totalorder %s20, 3
      %p64 = por %p62, %p63
      %p65 = scmp.ne.s32.totalorder %s54, %s55
      %p66 = scmp.eq.s32.totalorder %s20, 0
      %p67 = por %p65, %p66
      %p68 = scmp.ne.s32.totalorder %s54, %s55
      %p69 = scmp.eq.s32.totalorder %s21, 3
      %p70 = por %p68, %p69
      %p72 = scmp.ne.s32.totalorder %s55, %s71
      %p73 = scmp.eq.s32.totalorder %s21, 0
      %p74 = por %p72, %p73
      %s76 = sadd.s32 %s75, 1
      %p79 = scmp.eq.s32.totalorder %s15, 3
      %p80 = scmp.ne.s32.totalorder %s75, %s77
      %p81 = scmp.eq.s32.totalorder %s15, 0
      %p82 = por %p80, %p81
      %p83 = scmp.ne.s32.totalorder %s75, %s77
      %p84 = scmp.eq.s32.totalorder %s20, 3
      %p85 = por %p83, %p84
      %p86 = scmp.ne.s32.totalorder %s77, %s78
      %p87 = scmp.eq.s32.totalorder %s20, 0
      %p88 = por %p86, %p87
      %p89 = scmp.ne.s32.totalorder %s77, %s78
      %p90 = scmp.eq.s32.totalorder %s21, 3
      %p91 = por %p89, %p90
      %p93 = scmp.ne.s32.totalorder %s78, %s92
      %p94 = scmp.eq.s32.totalorder %s21, 0
      %p95 = por %p93, %p94
      %p96 = scmp.le.s32.totalorder 1, %s15
      %p97 = scmp.lt.s32.totalorder %s15, 5
      %p98 = pnand %p96, %p97
      %p99 = pneg %p98
      // Predicated region
      $region9: #{tpu_custom_call.1} parent=5 // pred_check
        _
      $region10: #{tpu_custom_call.1} parent=5 // pred_check_branch
        %101 = sbr.rel (%p98) target = $region12
      $region11: #{tpu_custom_call.1} parent=5 // pred_region
        %s102 = ssub.s32 %s15, 1
      $region12: #{tpu_custom_call.1} parent=5 // pred_fallthru
        _
      %p103 = scmp.lt.s32.totalorder %s15, 4
      // Predicated region
      $region13: #{tpu_custom_call.1} parent=5 // pred_check
        %p104 = pneg %p103
      $region14: #{tpu_custom_call.1} parent=5 // pred_check_branch
        %106 = sbr.rel (%p104) target = $region16
      $region15: #{tpu_custom_call.1} parent=5 // pred_region
        // Predicated region
        $region17: #{tpu_custom_call.1} parent=15 // pred_check
          %p107 = pneg %p35
        $region18: #{tpu_custom_call.1} parent=15 // pred_check_branch
          %109 = sbr.rel (%p107) target = $region20
        $region19: #{tpu_custom_call.1} parent=15 // pred_region
          %s110 = sand.u32 %s25, 1
          %s111 = scalar_lea.sflag [#allocation8], %s110
          %s112 = sand.u32 %s25, 1
          %s113 = smul.addr %s112, 128
          %s114 = scalar_lea.vmem [#allocation7], %s113
          %s115 = smul.u32 32, %s15
          %117 = vsyncadd %s111, 0
          %s118 = smul.addr %s115, 4
          %s119 = scalar_lea.hbm %s0, %s118
          %s121 = sshll.u32 %s119, 4
          %s122 = int_to_ptr.hbm [resolvable:$true] %s121
          %s123 = sshll.u32 %s114, 4
          %s124 = int_to_ptr.vmem [resolvable:$true] %s123
          %126 = dma.hbm_to_vmem [thread:$0]  %s122, 2048, %s124, %s111
        $region20: #{tpu_custom_call.1} parent=15 // pred_fallthru
          _
        // Predicated region
        $region21: #{tpu_custom_call.1} parent=15 // pred_check
          %p127 = pneg %p61
        $region22: #{tpu_custom_call.1} parent=15 // pred_check_branch
          %129 = sbr.rel (%p127) target = $region24
        $region23: #{tpu_custom_call.1} parent=15 // pred_region
          %s130 = sand.u32 %s51, 1
          %s131 = scalar_lea.sflag [#allocation11], %s130
          %s132 = sand.u32 %s51, 1
          %s133 = smul.addr %s132, 128
          %s134 = scalar_lea.vmem [#allocation10], %s133
          %s135 = smul.u32 32, %s15
          %137 = vsyncadd %s131, 0
          %s138 = smul.addr %s135, 4
          %s139 = scalar_lea.hbm %s1, %s138
          %s141 = sshll.u32 %s139, 4
          %s142 = int_to_ptr.hbm [resolvable:$true] %s141
          %s143 = sshll.u32 %s134, 4
          %s144 = int_to_ptr.vmem [resolvable:$true] %s143
          %146 = dma.hbm_to_vmem [thread:$0]  %s142, 2048, %s144, %s131
        $region24: #{tpu_custom_call.1} parent=15 // pred_fallthru
          _
      $region16: #{tpu_custom_call.1} parent=5 // pred_fallthru
        _
      %p147 = scmp.le.s32.totalorder 1, %s15
      %p148 = scmp.lt.s32.totalorder %s15, 5
      %p149 = pnand %p147, %p148
      %p150 = pneg %p149
      // Predicated region
      $region25: #{tpu_custom_call.1} parent=5 // pred_check
        _
      $region26: #{tpu_custom_call.1} parent=5 // pred_check_branch
        %152 = sbr.rel (%p149) target = $region28
      $region27: #{tpu_custom_call.1} parent=5 // pred_region
        %s153 = ssub.s32 %s15, 1
        %s154 = sand.u32 %s28, 1
        %s155 = scalar_lea.sflag [#allocation8], %s154
        %s156 = sand.u32 %s28, 1
        %s157 = smul.addr %s156, 128
        %s158 = scalar_lea.vmem [#allocation7], %s157
        // Predicated region
        $region29: #{tpu_custom_call.1} parent=27 // pred_check
          %p159 = pneg %p41
        $region30: #{tpu_custom_call.1} parent=27 // pred_check_branch
          %161 = sbr.rel (%p159) target = $region32
        $region31: #{tpu_custom_call.1} parent=27 // pred_region
          %163 = dma.done %s155, 2048
        $region32: #{tpu_custom_call.1} parent=27 // pred_fallthru
          _
        %s164 = sand.u32 %s54, 1
        %s165 = scalar_lea.sflag [#allocation11], %s164
        %s166 = sand.u32 %s54, 1
        %s167 = smul.addr %s166, 128
        %s168 = scalar_lea.vmem [#allocation10], %s167
        // Predicated region
        $region33: #{tpu_custom_call.1} parent=27 // pred_check
          %p169 = pneg %p67
        $region34: #{tpu_custom_call.1} parent=27 // pred_check_branch
          %171 = sbr.rel (%p169) target = $region36
        $region35: #{tpu_custom_call.1} parent=27 // pred_region
          %173 = dma.done %s165, 2048
        $region36: #{tpu_custom_call.1} parent=27 // pred_fallthru
          _
        %s174 = sand.u32 %s28, 1
        %s175 = scalar_lea.sflag [#allocation8], %s174
        %s176 = sand.u32 %s28, 1
        %s177 = smul.addr %s176, 128
        %s178 = scalar_lea.vmem [#allocation7], %s177
        %p179 = pneg %p41
        %p180 = pneg %p38
        %s181 = sand.u32 %s54, 1
        %s182 = scalar_lea.sflag [#allocation11], %s181
        %s183 = sand.u32 %s54, 1
        %s184 = smul.addr %s183, 128
        %s185 = scalar_lea.vmem [#allocation10], %s184
        %p186 = pneg %p67
        %p187 = pneg %p64
        %p188 = pneg %p88
        %p189 = pneg %p85
        %s190 = smul.u32 32, %s20
        %s191 = smul.u32 32, %s20
        %p192 = scmp.eq.s32.totalorder %s20, 0
        // Predicated region
        $region37: #{tpu_custom_call.1} parent=27 // pred_check
          %p193 = pneg %p192
        $region38: #{tpu_custom_call.1} parent=27 // pred_check_branch
          %195 = sbr.rel (%p193) target = $region40
        $region39: #{tpu_custom_call.1} parent=27 // pred_region
          %vm196 = vcmask 26624
          %197 = vst.msk [vmem:[#allocation2] sm:$0x7] %vm196, 0.0
          %vm198 = vcmask 2048
          %199 = vst.msk [vmem:[#allocation3] sm:$0x7] %vm198, 0.0
          %vm200 = vcmask 3072
          %201 = vst.msk [vmem:[#allocation4] sm:$0xf] %vm200, 0.0
          %202 = vst.msk [vmem:[#allocation5] sm:$0x7] %vm198, 0.0
          %203 = vst.msk [vmem:[#allocation6] sm:$0xf] %vm200, 0.0
        $region40: #{tpu_custom_call.1} parent=27 // pred_fallthru
          _
        %v204 = vld [vmem:[%s158] sm:$0x77]
        %v205 = vld [vmem:[%s158 + $0x8] sm:$0x77]
        %v206 = vld [vmem:[%s158 + $0x10] sm:$0x77]
        %v207 = vld [vmem:[%s158 + $0x18] sm:$0x77]
        %v208 = vld [vmem:[%s158 + $0x20] sm:$0x77]
        %v209 = vld [vmem:[%s158 + $0x28] sm:$0x77]
        %v210 = vld [vmem:[%s158 + $0x30] sm:$0x77]
        %v211 = vld [vmem:[%s158 + $0x38] sm:$0x77]
        %v212 = vld [vmem:[%s158 + $0x40] sm:$0x77]
        %v213 = vld [vmem:[%s158 + $0x48] sm:$0x77]
        %v214 = vld [vmem:[%s158 + $0x50] sm:$0x77]
        %v215 = vld [vmem:[%s158 + $0x58] sm:$0x77]
        %v216 = vld [vmem:[%s158 + $0x60] sm:$0x77]
        %v217 = vld [vmem:[%s158 + $0x68] sm:$0x77]
        %v218 = vld [vmem:[%s158 + $0x70] sm:$0x77]
        %v219 = vld [vmem:[%s158 + $0x78] sm:$0x77]
        %v220 = vld [vmem:[%s168] sm:$0xff]
        %v221 = vld [vmem:[%s168 + $0x8] sm:$0xff]
        %v222 = vld [vmem:[%s168 + $0x10] sm:$0xff]
        %v223 = vld [vmem:[%s168 + $0x18] sm:$0xff]
        %v224 = vld [vmem:[%s168 + $0x20] sm:$0xff]
        %v225 = vld [vmem:[%s168 + $0x28] sm:$0xff]
        %v226 = vld [vmem:[%s168 + $0x30] sm:$0xff]
        %v227 = vld [vmem:[%s168 + $0x38] sm:$0xff]
        %v228 = vld [vmem:[%s168 + $0x40] sm:$0xff]
        %v229 = vld [vmem:[%s168 + $0x48] sm:$0xff]
        %v230 = vld [vmem:[%s168 + $0x50] sm:$0xff]
        %v231 = vld [vmem:[%s168 + $0x58] sm:$0xff]
        %v232 = vld [vmem:[%s168 + $0x60] sm:$0xff]
        %v233 = vld [vmem:[%s168 + $0x68] sm:$0xff]
        %v234 = vld [vmem:[%s168 + $0x70] sm:$0xff]
        %v235 = vld [vmem:[%s168 + $0x78] sm:$0xff]
        %v236 = vld [vmem:[#allocation2] sm:$0x7]
        %253 = vst [vmem:[#allocation1] ss:$2 sm:$0xff] %v204
        %s254 = scalar_lea.vmem [#allocation1], 16
        %255 = vst [vmem:[%s254] ss:$2 sm:$0xff] %v205
        %s256 = scalar_lea.vmem [#allocation1], 32
        %257 = vst [vmem:[%s256] ss:$2 sm:$0xff] %v206
        %s258 = scalar_lea.vmem [#allocation1], 48
        %259 = vst [vmem:[%s258] ss:$2 sm:$0xff] %v207
        %v260 = vld.sshfl [vmem:[#allocation1] sm:$0xff pattern:$0x75316420]
        %v261 = vld.sshfl [vmem:[#allocation1 + $0x8] sm:$0xff pattern:$0x75316420]
        %v262 = vld.sshfl [vmem:[#allocation1 + $0x10] sm:$0xff pattern:$0x75316420]
        %v263 = vld.sshfl [vmem:[#allocation1 + $0x18] sm:$0xff pattern:$0x75316420]
        %v264 = vld.sshfl [vmem:[#allocation1 + $0x20] sm:$0xff pattern:$0x75316420]
        %v265 = vld.sshfl [vmem:[#allocation1 + $0x28] sm:$0xff pattern:$0x75316420]
        %v266 = vld.sshfl [vmem:[#allocation1 + $0x30] sm:$0xff pattern:$0x75316420]
        %v267 = vld.sshfl [vmem:[#allocation1 + $0x38] sm:$0xff pattern:$0x75316420]
        %268 = vst [vmem:[#allocation1] ss:$2 sm:$0xff] %v208
        %269 = vst [vmem:[%s254] ss:$2 sm:$0xff] %v209
        %270 = vst [vmem:[%s256] ss:$2 sm:$0xff] %v210
        %271 = vst [vmem:[%s258] ss:$2 sm:$0xff] %v211
        %v272 = vld.sshfl [vmem:[#allocation1] sm:$0xff pattern:$0x75316420]
        %v273 = vld.sshfl [vmem:[#allocation1 + $0x8] sm:$0xff pattern:$0x75316420]
        %v274 = vld.sshfl [vmem:[#allocation1 + $0x10] sm:$0xff pattern:$0x75316420]
        %v275 = vld.sshfl [vmem:[#allocation1 + $0x18] sm:$0xff pattern:$0x75316420]
        %v276 = vld.sshfl [vmem:[#allocation1 + $0x20] sm:$0xff pattern:$0x75316420]
        %v277 = vld.sshfl [vmem:[#allocation1 + $0x28] sm:$0xff pattern:$0x75316420]
        %v278 = vld.sshfl [vmem:[#allocation1 + $0x30] sm:$0xff pattern:$0x75316420]
        %v279 = vld.sshfl [vmem:[#allocation1 + $0x38] sm:$0xff pattern:$0x75316420]
        %280 = vst [vmem:[#allocation1] ss:$2 sm:$0xff] %v212
        %281 = vst [vmem:[%s254] ss:$2 sm:$0xff] %v213
        %282 = vst [vmem:[%s256] ss:$2 sm:$0xff] %v214
        %283 = vst [vmem:[%s258] ss:$2 sm:$0xff] %v215
        %v284 = vld.sshfl [vmem:[#allocation1] sm:$0xff pattern:$0x75316420]
        %v285 = vld.sshfl [vmem:[#allocation1 + $0x8] sm:$0xff pattern:$0x75316420]
        %v286 = vld.sshfl [vmem:[#allocation1 + $0x10] sm:$0xff pattern:$0x75316420]
        %v287 = vld.sshfl [vmem:[#allocation1 + $0x18] sm:$0xff pattern:$0x75316420]
        %v288 = vld.sshfl [vmem:[#allocation1 + $0x20] sm:$0xff pattern:$0x75316420]
        %v289 = vld.sshfl [vmem:[#allocation1 + $0x28] sm:$0xff pattern:$0x75316420]
        %v290 = vld.sshfl [vmem:[#allocation1 + $0x30] sm:$0xff pattern:$0x75316420]
        %v291 = vld.sshfl [vmem:[#allocation1 + $0x38] sm:$0xff pattern:$0x75316420]
        %292 = vst [vmem:[#allocation1] ss:$2 sm:$0xff] %v216
        %293 = vst [vmem:[%s254] ss:$2 sm:$0xff] %v217
        %294 = vst [vmem:[%s256] ss:$2 sm:$0xff] %v218
        %295 = vst [vmem:[%s258] ss:$2 sm:$0xff] %v219
        %v296 = vld.sshfl [vmem:[#allocation1] sm:$0xff pattern:$0x75316420]
        %v297 = vld.sshfl [vmem:[#allocation1 + $0x8] sm:$0xff pattern:$0x75316420]
        %v298 = vld.sshfl [vmem:[#allocation1 + $0x10] sm:$0xff pattern:$0x75316420]
        %v299 = vld.sshfl [vmem:[#allocation1 + $0x18] sm:$0xff pattern:$0x75316420]
        %v300 = vld.sshfl [vmem:[#allocation1 + $0x20] sm:$0xff pattern:$0x75316420]
        %v301 = vld.sshfl [vmem:[#allocation1 + $0x28] sm:$0xff pattern:$0x75316420]
        %v302 = vld.sshfl [vmem:[#allocation1 + $0x30] sm:$0xff pattern:$0x75316420]
        %v303 = vld.sshfl [vmem:[#allocation1 + $0x38] sm:$0xff pattern:$0x75316420]
        %352 = vst [vmem:[#allocation1] ss:$2 sm:$0xff] %v220
        %s353 = scalar_lea.vmem [#allocation1], 16
        %354 = vst [vmem:[%s353] ss:$2 sm:$0xff] %v221
        %s355 = scalar_lea.vmem [#allocation1], 32
        %356 = vst [vmem:[%s355] ss:$2 sm:$0xff] %v222
        %s357 = scalar_lea.vmem [#allocation1], 48
        %358 = vst [vmem:[%s357] ss:$2 sm:$0xff] %v223
        %v359 = vld.sshfl [vmem:[#allocation1] sm:$0xff pattern:$0x75316420]
        %v360 = vld.sshfl [vmem:[#allocation1 + $0x8] sm:$0xff pattern:$0x75316420]
        %v361 = vld.sshfl [vmem:[#allocation1 + $0x10] sm:$0xff pattern:$0x75316420]
        %v362 = vld.sshfl [vmem:[#allocation1 + $0x18] sm:$0xff pattern:$0x75316420]
        %v363 = vld.sshfl [vmem:[#allocation1 + $0x20] sm:$0xff pattern:$0x75316420]
        %v364 = vld.sshfl [vmem:[#allocation1 + $0x28] sm:$0xff pattern:$0x75316420]
        %v365 = vld.sshfl [vmem:[#allocation1 + $0x30] sm:$0xff pattern:$0x75316420]
        %v366 = vld.sshfl [vmem:[#allocation1 + $0x38] sm:$0xff pattern:$0x75316420]
        %367 = vst [vmem:[#allocation1] ss:$2 sm:$0xff] %v224
        %368 = vst [vmem:[%s353] ss:$2 sm:$0xff] %v225
        %369 = vst [vmem:[%s355] ss:$2 sm:$0xff] %v226
        %370 = vst [vmem:[%s357] ss:$2 sm:$0xff] %v227
        %v371 = vld.sshfl [vmem:[#allocation1] sm:$0xff pattern:$0x75316420]
        %v372 = vld.sshfl [vmem:[#allocation1 + $0x8] sm:$0xff pattern:$0x75316420]
        %v373 = vld.sshfl [vmem:[#allocation1 + $0x10] sm:$0xff pattern:$0x75316420]
        %v374 = vld.sshfl [vmem:[#allocation1 + $0x18] sm:$0xff pattern:$0x75316420]
        %v375 = vld.sshfl [vmem:[#allocation1 + $0x20] sm:$0xff pattern:$0x75316420]
        %v376 = vld.sshfl [vmem:[#allocation1 + $0x28] sm:$0xff pattern:$0x75316420]
        %v377 = vld.sshfl [vmem:[#allocation1 + $0x30] sm:$0xff pattern:$0x75316420]
        %v378 = vld.sshfl [vmem:[#allocation1 + $0x38] sm:$0xff pattern:$0x75316420]
        %379 = vst [vmem:[#allocation1] ss:$2 sm:$0xff] %v228
        %380 = vst [vmem:[%s353] ss:$2 sm:$0xff] %v229
        %381 = vst [vmem:[%s355] ss:$2 sm:$0xff] %v230
        %382 = vst [vmem:[%s357] ss:$2 sm:$0xff] %v231
        %v383 = vld.sshfl [vmem:[#allocation1] sm:$0xff pattern:$0x75316420]
        %v384 = vld.sshfl [vmem:[#allocation1 + $0x8] sm:$0xff pattern:$0x75316420]
        %v385 = vld.sshfl [vmem:[#allocation1 + $0x10] sm:$0xff pattern:$0x75316420]
        %v386 = vld.sshfl [vmem:[#allocation1 + $0x18] sm:$0xff pattern:$0x75316420]
        %v387 = vld.sshfl [vmem:[#allocation1 + $0x20] sm:$0xff pattern:$0x75316420]
        %v388 = vld.sshfl [vmem:[#allocation1 + $0x28] sm:$0xff pattern:$0x75316420]
        %v389 = vld.sshfl [vmem:[#allocation1 + $0x30] sm:$0xff pattern:$0x75316420]
        %v390 = vld.sshfl [vmem:[#allocation1 + $0x38] sm:$0xff pattern:$0x75316420]
        %391 = vst [vmem:[#allocation1] ss:$2 sm:$0xff] %v232
        %392 = vst [vmem:[%s353] ss:$2 sm:$0xff] %v233
        %393 = vst [vmem:[%s355] ss:$2 sm:$0xff] %v234
        %394 = vst [vmem:[%s357] ss:$2 sm:$0xff] %v235
        %v395 = vld.sshfl [vmem:[#allocation1] sm:$0xff pattern:$0x75316420]
        %v396 = vld.sshfl [vmem:[#allocation1 + $0x8] sm:$0xff pattern:$0x75316420]
        %v397 = vld.sshfl [vmem:[#allocation1 + $0x10] sm:$0xff pattern:$0x75316420]
        %v398 = vld.sshfl [vmem:[#allocation1 + $0x18] sm:$0xff pattern:$0x75316420]
        %v399 = vld.sshfl [vmem:[#allocation1 + $0x20] sm:$0xff pattern:$0x75316420]
        %v400 = vld.sshfl [vmem:[#allocation1 + $0x28] sm:$0xff pattern:$0x75316420]
        %v401 = vld.sshfl [vmem:[#allocation1 + $0x30] sm:$0xff pattern:$0x75316420]
        %v402 = vld.sshfl [vmem:[#allocation1 + $0x38] sm:$0xff pattern:$0x75316420]
        %435 = vmatpush.xpose.msra.mxu0 0.0
        %436 = vmatpush.xpose.msra.mxu0 0.0
        %437 = vmatpush.xpose.msra.mxu0 0.0
        %438 = vmatpush.xpose.msra.mxu0 0.0
        %439 = vmatpush.xpose.msra.mxu0 0.0
        %440 = vmatpush.xpose.msra.mxu0 0.0
        %441 = vmatpush.xpose.msra.mxu0 0.0
        %442 = vmatpush.xpose.msra.mxu0 0.0
        %443 = vmatpush.xpose.msra.mxu0 0.0
        %444 = vmatpush.xpose.msra.mxu0 0.0
        %445 = vmatpush.xpose.msra.mxu0 0.0
        %446 = vmatpush.xpose.msra.mxu0 0.0
        %447 = vmatpush.xpose.msra.mxu0 0.0
        %448 = vmatpush.xpose.msra.mxu0 0.0
        %449 = vmatpush.xpose.msra.mxu0 0.0
        %450 = vmatpush.xpose.msra.mxu0 %v359
        %451 = vmatmul.f32.gmra.mxu0 %v260
        %v452 = vpop.f32.mrf.mxu0
        %v453 = vadd.f32 0.0, %v452
        %454 = vdwg.mxu0
        %455 = vmatpush.xpose.msra.mxu0 0.0
        %456 = vmatpush.xpose.msra.mxu0 0.0
        %457 = vmatpush.xpose.msra.mxu0 0.0
        %458 = vmatpush.xpose.msra.mxu0 0.0
        %459 = vmatpush.xpose.msra.mxu0 0.0
        %460 = vmatpush.xpose.msra.mxu0 0.0
        %461 = vmatpush.xpose.msra.mxu0 0.0
        %462 = vmatpush.xpose.msra.mxu0 0.0
        %463 = vmatpush.xpose.msra.mxu0 0.0
        %464 = vmatpush.xpose.msra.mxu0 0.0
        %465 = vmatpush.xpose.msra.mxu0 0.0
        %466 = vmatpush.xpose.msra.mxu0 0.0
        %467 = vmatpush.xpose.msra.mxu0 0.0
        %468 = vmatpush.xpose.msra.mxu0 0.0
        %469 = vmatpush.xpose.msra.mxu0 0.0
        %470 = vmatpush.xpose.msra.mxu0 %v360
        %471 = vmatmul.f32.gmra.mxu0 %v261
        %v472 = vpop.f32.mrf.mxu0
        %v473 = vadd.f32 %v453, %v472
        %474 = vdwg.mxu0
        %475 = vmatpush.xpose.msra.mxu0 0.0
        %476 = vmatpush.xpose.msra.mxu0 0.0
        %477 = vmatpush.xpose.msra.mxu0 0.0
        %478 = vmatpush.xpose.msra.mxu0 0.0
        %479 = vmatpush.xpose.msra.mxu0 0.0
        %480 = vmatpush.xpose.msra.mxu0 0.0
        %481 = vmatpush.xpose.msra.mxu0 0.0
        %482 = vmatpush.xpose.msra.mxu0 0.0
        %483 = vmatpush.xpose.msra.mxu0 0.0
        %484 = vmatpush.xpose.msra.mxu0 0.0
        %485 = vmatpush.xpose.msra.mxu0 0.0
        %486 = vmatpush.xpose.msra.mxu0 0.0
        %487 = vmatpush.xpose.msra.mxu0 0.0
        %488 = vmatpush.xpose.msra.mxu0 0.0
        %489 = vmatpush.xpose.msra.mxu0 0.0
        %490 = vmatpush.xpose.msra.mxu0 %v361
        %491 = vmatmul.f32.gmra.mxu0 %v262
        %v492 = vpop.f32.mrf.mxu0
        %v493 = vadd.f32 %v473, %v492
        %494 = vdwg.mxu0
        %495 = vmatpush.xpose.msra.mxu0 0.0
        %496 = vmatpush.xpose.msra.mxu0 0.0
        %497 = vmatpush.xpose.msra.mxu0 0.0
        %498 = vmatpush.xpose.msra.mxu0 0.0
        %499 = vmatpush.xpose.msra.mxu0 0.0
        %500 = vmatpush.xpose.msra.mxu0 0.0
        %501 = vmatpush.xpose.msra.mxu0 0.0
        %502 = vmatpush.xpose.msra.mxu0 0.0
        %503 = vmatpush.xpose.msra.mxu0 0.0
        %504 = vmatpush.xpose.msra.mxu0 0.0
        %505 = vmatpush.xpose.msra.mxu0 0.0
        %506 = vmatpush.xpose.msra.mxu0 0.0
        %507 = vmatpush.xpose.msra.mxu0 0.0
        %508 = vmatpush.xpose.msra.mxu0 0.0
        %509 = vmatpush.xpose.msra.mxu0 0.0
        %510 = vmatpush.xpose.msra.mxu0 %v362
        %511 = vmatmul.f32.gmra.mxu0 %v263
        %v512 = vpop.f32.mrf.mxu0
        %v513 = vadd.f32 %v493, %v512
        %514 = vdwg.mxu0
        %515 = vmatpush.xpose.msra.mxu0 0.0
        %516 = vmatpush.xpose.msra.mxu0 0.0
        %517 = vmatpush.xpose.msra.mxu0 0.0
        %518 = vmatpush.xpose.msra.mxu0 0.0
        %519 = vmatpush.xpose.msra.mxu0 0.0
        %520 = vmatpush.xpose.msra.mxu0 0.0
        %521 = vmatpush.xpose.msra.mxu0 0.0
        %522 = vmatpush.xpose.msra.mxu0 0.0
        %523 = vmatpush.xpose.msra.mxu0 0.0
        %524 = vmatpush.xpose.msra.mxu0 0.0
        %525 = vmatpush.xpose.msra.mxu0 0.0
        %526 = vmatpush.xpose.msra.mxu0 0.0
        %527 = vmatpush.xpose.msra.mxu0 0.0
        %528 = vmatpush.xpose.msra.mxu0 0.0
        %529 = vmatpush.xpose.msra.mxu0 0.0
        %530 = vmatpush.xpose.msra.mxu0 %v363
        %531 = vmatmul.f32.gmra.mxu0 %v264
        %v532 = vpop.f32.mrf.mxu0
        %v533 = vadd.f32 %v513, %v532
        %534 = vdwg.mxu0
        %535 = vmatpush.xpose.msra.mxu0 0.0
        %536 = vmatpush.xpose.msra.mxu0 0.0
        %537 = vmatpush.xpose.msra.mxu0 0.0
        %538 = vmatpush.xpose.msra.mxu0 0.0
        %539 = vmatpush.xpose.msra.mxu0 0.0
        %540 = vmatpush.xpose.msra.mxu0 0.0
        %541 = vmatpush.xpose.msra.mxu0 0.0
        %542 = vmatpush.xpose.msra.mxu0 0.0
        %543 = vmatpush.xpose.msra.mxu0 0.0
        %544 = vmatpush.xpose.msra.mxu0 0.0
        %545 = vmatpush.xpose.msra.mxu0 0.0
        %546 = vmatpush.xpose.msra.mxu0 0.0
        %547 = vmatpush.xpose.msra.mxu0 0.0
        %548 = vmatpush.xpose.msra.mxu0 0.0
        %549 = vmatpush.xpose.msra.mxu0 0.0
        %550 = vmatpush.xpose.msra.mxu0 %v364
        %551 = vmatmul.f32.gmra.mxu0 %v265
        %v552 = vpop.f32.mrf.mxu0
        %v553 = vadd.f32 %v533, %v552
        %554 = vdwg.mxu0
        %555 = vmatpush.xpose.msra.mxu0 0.0
        %556 = vmatpush.xpose.msra.mxu0 0.0
        %557 = vmatpush.xpose.msra.mxu0 0.0
        %558 = vmatpush.xpose.msra.mxu0 0.0
        %559 = vmatpush.xpose.msra.mxu0 0.0
        %560 = vmatpush.xpose.msra.mxu0 0.0
        %561 = vmatpush.xpose.msra.mxu0 0.0
        %562 = vmatpush.xpose.msra.mxu0 0.0
        %563 = vmatpush.xpose.msra.mxu0 0.0
        %564 = vmatpush.xpose.msra.mxu0 0.0
        %565 = vmatpush.xpose.msra.mxu0 0.0
        %566 = vmatpush.xpose.msra.mxu0 0.0
        %567 = vmatpush.xpose.msra.mxu0 0.0
        %568 = vmatpush.xpose.msra.mxu0 0.0
        %569 = vmatpush.xpose.msra.mxu0 0.0
        %570 = vmatpush.xpose.msra.mxu0 %v365
        %571 = vmatmul.f32.gmra.mxu0 %v266
        %v572 = vpop.f32.mrf.mxu0
        %v573 = vadd.f32 %v553, %v572
        %574 = vdwg.mxu0
        %575 = vmatpush.xpose.msra.mxu0 0.0
        %576 = vmatpush.xpose.msra.mxu0 0.0
        %577 = vmatpush.xpose.msra.mxu0 0.0
        %578 = vmatpush.xpose.msra.mxu0 0.0
        %579 = vmatpush.xpose.msra.mxu0 0.0
        %580 = vmatpush.xpose.msra.mxu0 0.0
        %581 = vmatpush.xpose.msra.mxu0 0.0
        %582 = vmatpush.xpose.msra.mxu0 0.0
        %583 = vmatpush.xpose.msra.mxu0 0.0
        %584 = vmatpush.xpose.msra.mxu0 0.0
        %585 = vmatpush.xpose.msra.mxu0 0.0
        %586 = vmatpush.xpose.msra.mxu0 0.0
        %587 = vmatpush.xpose.msra.mxu0 0.0
        %588 = vmatpush.xpose.msra.mxu0 0.0
        %589 = vmatpush.xpose.msra.mxu0 0.0
        %590 = vmatpush.xpose.msra.mxu0 %v366
        %591 = vmatmul.f32.gmra.mxu0 %v267
        %v592 = vpop.f32.mrf.mxu0
        %v593 = vadd.f32 %v573, %v592
        %594 = vdwg.mxu0
        %595 = vmatpush.xpose.msra.mxu0 0.0
        %596 = vmatpush.xpose.msra.mxu0 0.0
        %597 = vmatpush.xpose.msra.mxu0 0.0
        %598 = vmatpush.xpose.msra.mxu0 0.0
        %599 = vmatpush.xpose.msra.mxu0 0.0
        %600 = vmatpush.xpose.msra.mxu0 0.0
        %601 = vmatpush.xpose.msra.mxu0 0.0
        %602 = vmatpush.xpose.msra.mxu0 0.0
        %603 = vmatpush.xpose.msra.mxu0 0.0
        %604 = vmatpush.xpose.msra.mxu0 0.0
        %605 = vmatpush.xpose.msra.mxu0 0.0
        %606 = vmatpush.xpose.msra.mxu0 0.0
        %607 = vmatpush.xpose.msra.mxu0 0.0
        %608 = vmatpush.xpose.msra.mxu0 0.0
        %609 = vmatpush.xpose.msra.mxu0 0.0
        %610 = vmatpush.xpose.msra.mxu0 %v371
        %611 = vmatmul.f32.gmra.mxu0 %v272
        %v612 = vpop.f32.mrf.mxu0
        %v613 = vadd.f32 %v593, %v612
        %614 = vdwg.mxu0
        %615 = vmatpush.xpose.msra.mxu0 0.0
        %616 = vmatpush.xpose.msra.mxu0 0.0
        %617 = vmatpush.xpose.msra.mxu0 0.0
        %618 = vmatpush.xpose.msra.mxu0 0.0
        %619 = vmatpush.xpose.msra.mxu0 0.0
        %620 = vmatpush.xpose.msra.mxu0 0.0
        %621 = vmatpush.xpose.msra.mxu0 0.0
        %622 = vmatpush.xpose.msra.mxu0 0.0
        %623 = vmatpush.xpose.msra.mxu0 0.0
        %624 = vmatpush.xpose.msra.mxu0 0.0
        %625 = vmatpush.xpose.msra.mxu0 0.0
        %626 = vmatpush.xpose.msra.mxu0 0.0
        %627 = vmatpush.xpose.msra.mxu0 0.0
        %628 = vmatpush.xpose.msra.mxu0 0.0
        %629 = vmatpush.xpose.msra.mxu0 0.0
        %630 = vmatpush.xpose.msra.mxu0 %v372
        %631 = vmatmul.f32.gmra.mxu0 %v273
        %v632 = vpop.f32.mrf.mxu0
        %v633 = vadd.f32 %v613, %v632
        %634 = vdwg.mxu0
        %635 = vmatpush.xpose.msra.mxu0 0.0
        %636 = vmatpush.xpose.msra.mxu0 0.0
        %637 = vmatpush.xpose.msra.mxu0 0.0
        %638 = vmatpush.xpose.msra.mxu0 0.0
        %639 = vmatpush.xpose.msra.mxu0 0.0
        %640 = vmatpush.xpose.msra.mxu0 0.0
        %641 = vmatpush.xpose.msra.mxu0 0.0
        %642 = vmatpush.xpose.msra.mxu0 0.0
        %643 = vmatpush.xpose.msra.mxu0 0.0
        %644 = vmatpush.xpose.msra.mxu0 0.0
        %645 = vmatpush.xpose.msra.mxu0 0.0
        %646 = vmatpush.xpose.msra.mxu0 0.0
        %647 = vmatpush.xpose.msra.mxu0 0.0
        %648 = vmatpush.xpose.msra.mxu0 0.0
        %649 = vmatpush.xpose.msra.mxu0 0.0
        %650 = vmatpush.xpose.msra.mxu0 %v373
        %651 = vmatmul.f32.gmra.mxu0 %v274
        %v652 = vpop.f32.mrf.mxu0
        %v653 = vadd.f32 %v633, %v652
        %654 = vdwg.mxu0
        %655 = vmatpush.xpose.msra.mxu0 0.0
        %656 = vmatpush.xpose.msra.mxu0 0.0
        %657 = vmatpush.xpose.msra.mxu0 0.0
        %658 = vmatpush.xpose.msra.mxu0 0.0
        %659 = vmatpush.xpose.msra.mxu0 0.0
        %660 = vmatpush.xpose.msra.mxu0 0.0
        %661 = vmatpush.xpose.msra.mxu0 0.0
        %662 = vmatpush.xpose.msra.mxu0 0.0
        %663 = vmatpush.xpose.msra.mxu0 0.0
        %664 = vmatpush.xpose.msra.mxu0 0.0
        %665 = vmatpush.xpose.msra.mxu0 0.0
        %666 = vmatpush.xpose.msra.mxu0 0.0
        %667 = vmatpush.xpose.msra.mxu0 0.0
        %668 = vmatpush.xpose.msra.mxu0 0.0
        %669 = vmatpush.xpose.msra.mxu0 0.0
        %670 = vmatpush.xpose.msra.mxu0 %v374
        %671 = vmatmul.f32.gmra.mxu0 %v275
        %v672 = vpop.f32.mrf.mxu0
        %v673 = vadd.f32 %v653, %v672
        %674 = vdwg.mxu0
        %675 = vmatpush.xpose.msra.mxu0 0.0
        %676 = vmatpush.xpose.msra.mxu0 0.0
        %677 = vmatpush.xpose.msra.mxu0 0.0
        %678 = vmatpush.xpose.msra.mxu0 0.0
        %679 = vmatpush.xpose.msra.mxu0 0.0
        %680 = vmatpush.xpose.msra.mxu0 0.0
        %681 = vmatpush.xpose.msra.mxu0 0.0
        %682 = vmatpush.xpose.msra.mxu0 0.0
        %683 = vmatpush.xpose.msra.mxu0 0.0
        %684 = vmatpush.xpose.msra.mxu0 0.0
        %685 = vmatpush.xpose.msra.mxu0 0.0
        %686 = vmatpush.xpose.msra.mxu0 0.0
        %687 = vmatpush.xpose.msra.mxu0 0.0
        %688 = vmatpush.xpose.msra.mxu0 0.0
        %689 = vmatpush.xpose.msra.mxu0 0.0
        %690 = vmatpush.xpose.msra.mxu0 %v375
        %691 = vmatmul.f32.gmra.mxu0 %v276
        %v692 = vpop.f32.mrf.mxu0
        %v693 = vadd.f32 %v673, %v692
        %694 = vdwg.mxu0
        %695 = vmatpush.xpose.msra.mxu0 0.0
        %696 = vmatpush.xpose.msra.mxu0 0.0
        %697 = vmatpush.xpose.msra.mxu0 0.0
        %698 = vmatpush.xpose.msra.mxu0 0.0
        %699 = vmatpush.xpose.msra.mxu0 0.0
        %700 = vmatpush.xpose.msra.mxu0 0.0
        %701 = vmatpush.xpose.msra.mxu0 0.0
        %702 = vmatpush.xpose.msra.mxu0 0.0
        %703 = vmatpush.xpose.msra.mxu0 0.0
        %704 = vmatpush.xpose.msra.mxu0 0.0
        %705 = vmatpush.xpose.msra.mxu0 0.0
        %706 = vmatpush.xpose.msra.mxu0 0.0
        %707 = vmatpush.xpose.msra.mxu0 0.0
        %708 = vmatpush.xpose.msra.mxu0 0.0
        %709 = vmatpush.xpose.msra.mxu0 0.0
        %710 = vmatpush.xpose.msra.mxu0 %v376
        %711 = vmatmul.f32.gmra.mxu0 %v277
        %v712 = vpop.f32.mrf.mxu0
        %v713 = vadd.f32 %v693, %v712
        %714 = vdwg.mxu0
        %715 = vmatpush.xpose.msra.mxu0 0.0
        %716 = vmatpush.xpose.msra.mxu0 0.0
        %717 = vmatpush.xpose.msra.mxu0 0.0
        %718 = vmatpush.xpose.msra.mxu0 0.0
        %719 = vmatpush.xpose.msra.mxu0 0.0
        %720 = vmatpush.xpose.msra.mxu0 0.0
        %721 = vmatpush.xpose.msra.mxu0 0.0
        %722 = vmatpush.xpose.msra.mxu0 0.0
        %723 = vmatpush.xpose.msra.mxu0 0.0
        %724 = vmatpush.xpose.msra.mxu0 0.0
        %725 = vmatpush.xpose.msra.mxu0 0.0
        %726 = vmatpush.xpose.msra.mxu0 0.0
        %727 = vmatpush.xpose.msra.mxu0 0.0
        %728 = vmatpush.xpose.msra.mxu0 0.0
        %729 = vmatpush.xpose.msra.mxu0 0.0
        %730 = vmatpush.xpose.msra.mxu0 %v377
        %731 = vmatmul.f32.gmra.mxu0 %v278
        %v732 = vpop.f32.mrf.mxu0
        %v733 = vadd.f32 %v713, %v732
        %734 = vdwg.mxu0
        %735 = vmatpush.xpose.msra.mxu0 0.0
        %736 = vmatpush.xpose.msra.mxu0 0.0
        %737 = vmatpush.xpose.msra.mxu0 0.0
        %738 = vmatpush.xpose.msra.mxu0 0.0
        %739 = vmatpush.xpose.msra.mxu0 0.0
        %740 = vmatpush.xpose.msra.mxu0 0.0
        %741 = vmatpush.xpose.msra.mxu0 0.0
        %742 = vmatpush.xpose.msra.mxu0 0.0
        %743 = vmatpush.xpose.msra.mxu0 0.0
        %744 = vmatpush.xpose.msra.mxu0 0.0
        %745 = vmatpush.xpose.msra.mxu0 0.0
        %746 = vmatpush.xpose.msra.mxu0 0.0
        %747 = vmatpush.xpose.msra.mxu0 0.0
        %748 = vmatpush.xpose.msra.mxu0 0.0
        %749 = vmatpush.xpose.msra.mxu0 0.0
        %750 = vmatpush.xpose.msra.mxu0 %v378
        %751 = vmatmul.f32.gmra.mxu0 %v279
        %v752 = vpop.f32.mrf.mxu0
        %v753 = vadd.f32 %v733, %v752
        %754 = vdwg.mxu0
        %755 = vmatpush.xpose.msra.mxu0 0.0
        %756 = vmatpush.xpose.msra.mxu0 0.0
        %757 = vmatpush.xpose.msra.mxu0 0.0
        %758 = vmatpush.xpose.msra.mxu0 0.0
        %759 = vmatpush.xpose.msra.mxu0 0.0
        %760 = vmatpush.xpose.msra.mxu0 0.0
        %761 = vmatpush.xpose.msra.mxu0 0.0
        %762 = vmatpush.xpose.msra.mxu0 0.0
        %763 = vmatpush.xpose.msra.mxu0 0.0
        %764 = vmatpush.xpose.msra.mxu0 0.0
        %765 = vmatpush.xpose.msra.mxu0 0.0
        %766 = vmatpush.xpose.msra.mxu0 0.0
        %767 = vmatpush.xpose.msra.mxu0 0.0
        %768 = vmatpush.xpose.msra.mxu0 0.0
        %769 = vmatpush.xpose.msra.mxu0 0.0
        %770 = vmatpush.xpose.msra.mxu0 %v383
        %771 = vmatmul.f32.gmra.mxu0 %v284
        %v772 = vpop.f32.mrf.mxu0
        %v773 = vadd.f32 %v753, %v772
        %774 = vdwg.mxu0
        %775 = vmatpush.xpose.msra.mxu0 0.0
        %776 = vmatpush.xpose.msra.mxu0 0.0
        %777 = vmatpush.xpose.msra.mxu0 0.0
        %778 = vmatpush.xpose.msra.mxu0 0.0
        %779 = vmatpush.xpose.msra.mxu0 0.0
        %780 = vmatpush.xpose.msra.mxu0 0.0
        %781 = vmatpush.xpose.msra.mxu0 0.0
        %782 = vmatpush.xpose.msra.mxu0 0.0
        %783 = vmatpush.xpose.msra.mxu0 0.0
        %784 = vmatpush.xpose.msra.mxu0 0.0
        %785 = vmatpush.xpose.msra.mxu0 0.0
        %786 = vmatpush.xpose.msra.mxu0 0.0
        %787 = vmatpush.xpose.msra.mxu0 0.0
        %788 = vmatpush.xpose.msra.mxu0 0.0
        %789 = vmatpush.xpose.msra.mxu0 0.0
        %790 = vmatpush.xpose.msra.mxu0 %v384
        %791 = vmatmul.f32.gmra.mxu0 %v285
        %v792 = vpop.f32.mrf.mxu0
        %v793 = vadd.f32 %v773, %v792
        %794 = vdwg.mxu0
        %795 = vmatpush.xpose.msra.mxu0 0.0
        %796 = vmatpush.xpose.msra.mxu0 0.0
        %797 = vmatpush.xpose.msra.mxu0 0.0
        %798 = vmatpush.xpose.msra.mxu0 0.0
        %799 = vmatpush.xpose.msra.mxu0 0.0
        %800 = vmatpush.xpose.msra.mxu0 0.0
        %801 = vmatpush.xpose.msra.mxu0 0.0
        %802 = vmatpush.xpose.msra.mxu0 0.0
        %803 = vmatpush.xpose.msra.mxu0 0.0
        %804 = vmatpush.xpose.msra.mxu0 0.0
        %805 = vmatpush.xpose.msra.mxu0 0.0
        %806 = vmatpush.xpose.msra.mxu0 0.0
        %807 = vmatpush.xpose.msra.mxu0 0.0
        %808 = vmatpush.xpose.msra.mxu0 0.0
        %809 = vmatpush.xpose.msra.mxu0 0.0
        %810 = vmatpush.xpose.msra.mxu0 %v385
        %811 = vmatmul.f32.gmra.mxu0 %v286
        %v812 = vpop.f32.mrf.mxu0
        %v813 = vadd.f32 %v793, %v812
        %814 = vdwg.mxu0
        %815 = vmatpush.xpose.msra.mxu0 0.0
        %816 = vmatpush.xpose.msra.mxu0 0.0
        %817 = vmatpush.xpose.msra.mxu0 0.0
        %818 = vmatpush.xpose.msra.mxu0 0.0
        %819 = vmatpush.xpose.msra.mxu0 0.0
        %820 = vmatpush.xpose.msra.mxu0 0.0
        %821 = vmatpush.xpose.msra.mxu0 0.0
        %822 = vmatpush.xpose.msra.mxu0 0.0
        %823 = vmatpush.xpose.msra.mxu0 0.0
        %824 = vmatpush.xpose.msra.mxu0 0.0
        %825 = vmatpush.xpose.msra.mxu0 0.0
        %826 = vmatpush.xpose.msra.mxu0 0.0
        %827 = vmatpush.xpose.msra.mxu0 0.0
        %828 = vmatpush.xpose.msra.mxu0 0.0
        %829 = vmatpush.xpose.msra.mxu0 0.0
        %830 = vmatpush.xpose.msra.mxu0 %v386
        %831 = vmatmul.f32.gmra.mxu0 %v287
        %v832 = vpop.f32.mrf.mxu0
        %v833 = vadd.f32 %v813, %v832
        %834 = vdwg.mxu0
        %835 = vmatpush.xpose.msra.mxu0 0.0
        %836 = vmatpush.xpose.msra.mxu0 0.0
        %837 = vmatpush.xpose.msra.mxu0 0.0
        %838 = vmatpush.xpose.msra.mxu0 0.0
        %839 = vmatpush.xpose.msra.mxu0 0.0
        %840 = vmatpush.xpose.msra.mxu0 0.0
        %841 = vmatpush.xpose.msra.mxu0 0.0
        %842 = vmatpush.xpose.msra.mxu0 0.0
        %843 = vmatpush.xpose.msra.mxu0 0.0
        %844 = vmatpush.xpose.msra.mxu0 0.0
        %845 = vmatpush.xpose.msra.mxu0 0.0
        %846 = vmatpush.xpose.msra.mxu0 0.0
        %847 = vmatpush.xpose.msra.mxu0 0.0
        %848 = vmatpush.xpose.msra.mxu0 0.0
        %849 = vmatpush.xpose.msra.mxu0 0.0
        %850 = vmatpush.xpose.msra.mxu0 %v387
        %851 = vmatmul.f32.gmra.mxu0 %v288
        %v852 = vpop.f32.mrf.mxu0
        %v853 = vadd.f32 %v833, %v852
        %854 = vdwg.mxu0
        %855 = vmatpush.xpose.msra.mxu0 0.0
        %856 = vmatpush.xpose.msra.mxu0 0.0
        %857 = vmatpush.xpose.msra.mxu0 0.0
        %858 = vmatpush.xpose.msra.mxu0 0.0
        %859 = vmatpush.xpose.msra.mxu0 0.0
        %860 = vmatpush.xpose.msra.mxu0 0.0
        %861 = vmatpush.xpose.msra.mxu0 0.0
        %862 = vmatpush.xpose.msra.mxu0 0.0
        %863 = vmatpush.xpose.msra.mxu0 0.0
        %864 = vmatpush.xpose.msra.mxu0 0.0
        %865 = vmatpush.xpose.msra.mxu0 0.0
        %866 = vmatpush.xpose.msra.mxu0 0.0
        %867 = vmatpush.xpose.msra.mxu0 0.0
        %868 = vmatpush.xpose.msra.mxu0 0.0
        %869 = vmatpush.xpose.msra.mxu0 0.0
        %870 = vmatpush.xpose.msra.mxu0 %v388
        %871 = vmatmul.f32.gmra.mxu0 %v289
        %v872 = vpop.f32.mrf.mxu0
        %v873 = vadd.f32 %v853, %v872
        %874 = vdwg.mxu0
        %875 = vmatpush.xpose.msra.mxu0 0.0
        %876 = vmatpush.xpose.msra.mxu0 0.0
        %877 = vmatpush.xpose.msra.mxu0 0.0
        %878 = vmatpush.xpose.msra.mxu0 0.0
        %879 = vmatpush.xpose.msra.mxu0 0.0
        %880 = vmatpush.xpose.msra.mxu0 0.0
        %881 = vmatpush.xpose.msra.mxu0 0.0
        %882 = vmatpush.xpose.msra.mxu0 0.0
        %883 = vmatpush.xpose.msra.mxu0 0.0
        %884 = vmatpush.xpose.msra.mxu0 0.0
        %885 = vmatpush.xpose.msra.mxu0 0.0
        %886 = vmatpush.xpose.msra.mxu0 0.0
        %887 = vmatpush.xpose.msra.mxu0 0.0
        %888 = vmatpush.xpose.msra.mxu0 0.0
        %889 = vmatpush.xpose.msra.mxu0 0.0
        %890 = vmatpush.xpose.msra.mxu0 %v389
        %891 = vmatmul.f32.gmra.mxu0 %v290
        %v892 = vpop.f32.mrf.mxu0
        %v893 = vadd.f32 %v873, %v892
        %894 = vdwg.mxu0
        %895 = vmatpush.xpose.msra.mxu0 0.0
        %896 = vmatpush.xpose.msra.mxu0 0.0
        %897 = vmatpush.xpose.msra.mxu0 0.0
        %898 = vmatpush.xpose.msra.mxu0 0.0
        %899 = vmatpush.xpose.msra.mxu0 0.0
        %900 = vmatpush.xpose.msra.mxu0 0.0
        %901 = vmatpush.xpose.msra.mxu0 0.0
        %902 = vmatpush.xpose.msra.mxu0 0.0
        %903 = vmatpush.xpose.msra.mxu0 0.0
        %904 = vmatpush.xpose.msra.mxu0 0.0
        %905 = vmatpush.xpose.msra.mxu0 0.0
        %906 = vmatpush.xpose.msra.mxu0 0.0
        %907 = vmatpush.xpose.msra.mxu0 0.0
        %908 = vmatpush.xpose.msra.mxu0 0.0
        %909 = vmatpush.xpose.msra.mxu0 0.0
        %910 = vmatpush.xpose.msra.mxu0 %v390
        %911 = vmatmul.f32.gmra.mxu0 %v291
        %v912 = vpop.f32.mrf.mxu0
        %v913 = vadd.f32 %v893, %v912
        %914 = vdwg.mxu0
        %915 = vmatpush.xpose.msra.mxu0 0.0
        %916 = vmatpush.xpose.msra.mxu0 0.0
        %917 = vmatpush.xpose.msra.mxu0 0.0
        %918 = vmatpush.xpose.msra.mxu0 0.0
        %919 = vmatpush.xpose.msra.mxu0 0.0
        %920 = vmatpush.xpose.msra.mxu0 0.0
        %921 = vmatpush.xpose.msra.mxu0 0.0
        %922 = vmatpush.xpose.msra.mxu0 0.0
        %923 = vmatpush.xpose.msra.mxu0 0.0
        %924 = vmatpush.xpose.msra.mxu0 0.0
        %925 = vmatpush.xpose.msra.mxu0 0.0
        %926 = vmatpush.xpose.msra.mxu0 0.0
        %927 = vmatpush.xpose.msra.mxu0 0.0
        %928 = vmatpush.xpose.msra.mxu0 0.0
        %929 = vmatpush.xpose.msra.mxu0 0.0
        %930 = vmatpush.xpose.msra.mxu0 %v395
        %931 = vmatmul.f32.gmra.mxu0 %v296
        %v932 = vpop.f32.mrf.mxu0
        %v933 = vadd.f32 %v913, %v932
        %934 = vdwg.mxu0
        %935 = vmatpush.xpose.msra.mxu0 0.0
        %936 = vmatpush.xpose.msra.mxu0 0.0
        %937 = vmatpush.xpose.msra.mxu0 0.0
        %938 = vmatpush.xpose.msra.mxu0 0.0
        %939 = vmatpush.xpose.msra.mxu0 0.0
        %940 = vmatpush.xpose.msra.mxu0 0.0
        %941 = vmatpush.xpose.msra.mxu0 0.0
        %942 = vmatpush.xpose.msra.mxu0 0.0
        %943 = vmatpush.xpose.msra.mxu0 0.0
        %944 = vmatpush.xpose.msra.mxu0 0.0
        %945 = vmatpush.xpose.msra.mxu0 0.0
        %946 = vmatpush.xpose.msra.mxu0 0.0
        %947 = vmatpush.xpose.msra.mxu0 0.0
        %948 = vmatpush.xpose.msra.mxu0 0.0
        %949 = vmatpush.xpose.msra.mxu0 0.0
        %950 = vmatpush.xpose.msra.mxu0 %v396
        %951 = vmatmul.f32.gmra.mxu0 %v297
        %v952 = vpop.f32.mrf.mxu0
        %v953 = vadd.f32 %v933, %v952
        %954 = vdwg.mxu0
        %955 = vmatpush.xpose.msra.mxu0 0.0
        %956 = vmatpush.xpose.msra.mxu0 0.0
        %957 = vmatpush.xpose.msra.mxu0 0.0
        %958 = vmatpush.xpose.msra.mxu0 0.0
        %959 = vmatpush.xpose.msra.mxu0 0.0
        %960 = vmatpush.xpose.msra.mxu0 0.0
        %961 = vmatpush.xpose.msra.mxu0 0.0
        %962 = vmatpush.xpose.msra.mxu0 0.0
        %963 = vmatpush.xpose.msra.mxu0 0.0
        %964 = vmatpush.xpose.msra.mxu0 0.0
        %965 = vmatpush.xpose.msra.mxu0 0.0
        %966 = vmatpush.xpose.msra.mxu0 0.0
        %967 = vmatpush.xpose.msra.mxu0 0.0
        %968 = vmatpush.xpose.msra.mxu0 0.0
        %969 = vmatpush.xpose.msra.mxu0 0.0
        %970 = vmatpush.xpose.msra.mxu0 %v397
        %971 = vmatmul.f32.gmra.mxu0 %v298
        %v972 = vpop.f32.mrf.mxu0
        %v973 = vadd.f32 %v953, %v972
        %974 = vdwg.mxu0
        %975 = vmatpush.xpose.msra.mxu0 0.0
        %976 = vmatpush.xpose.msra.mxu0 0.0
        %977 = vmatpush.xpose.msra.mxu0 0.0
        %978 = vmatpush.xpose.msra.mxu0 0.0
        %979 = vmatpush.xpose.msra.mxu0 0.0
        %980 = vmatpush.xpose.msra.mxu0 0.0
        %981 = vmatpush.xpose.msra.mxu0 0.0
        %982 = vmatpush.xpose.msra.mxu0 0.0
        %983 = vmatpush.xpose.msra.mxu0 0.0
        %984 = vmatpush.xpose.msra.mxu0 0.0
        %985 = vmatpush.xpose.msra.mxu0 0.0
        %986 = vmatpush.xpose.msra.mxu0 0.0
        %987 = vmatpush.xpose.msra.mxu0 0.0
        %988 = vmatpush.xpose.msra.mxu0 0.0
        %989 = vmatpush.xpose.msra.mxu0 0.0
        %990 = vmatpush.xpose.msra.mxu0 %v398
        %991 = vmatmul.f32.gmra.mxu0 %v299
        %v992 = vpop.f32.mrf.mxu0
        %v993 = vadd.f32 %v973, %v992
        %994 = vdwg.mxu0
        %995 = vmatpush.xpose.msra.mxu0 0.0
        %996 = vmatpush.xpose.msra.mxu0 0.0
        %997 = vmatpush.xpose.msra.mxu0 0.0
        %998 = vmatpush.xpose.msra.mxu0 0.0
        %999 = vmatpush.xpose.msra.mxu0 0.0
        %1000 = vmatpush.xpose.msra.mxu0 0.0
        %1001 = vmatpush.xpose.msra.mxu0 0.0
        %1002 = vmatpush.xpose.msra.mxu0 0.0
        %1003 = vmatpush.xpose.msra.mxu0 0.0
        %1004 = vmatpush.xpose.msra.mxu0 0.0
        %1005 = vmatpush.xpose.msra.mxu0 0.0
        %1006 = vmatpush.xpose.msra.mxu0 0.0
        %1007 = vmatpush.xpose.msra.mxu0 0.0
        %1008 = vmatpush.xpose.msra.mxu0 0.0
        %1009 = vmatpush.xpose.msra.mxu0 0.0
        %1010 = vmatpush.xpose.msra.mxu0 %v399
        %1011 = vmatmul.f32.gmra.mxu0 %v300
        %v1012 = vpop.f32.mrf.mxu0
        %v1013 = vadd.f32 %v993, %v1012
        %1014 = vdwg.mxu0
        %1015 = vmatpush.xpose.msra.mxu0 0.0
        %1016 = vmatpush.xpose.msra.mxu0 0.0
        %1017 = vmatpush.xpose.msra.mxu0 0.0
        %1018 = vmatpush.xpose.msra.mxu0 0.0
        %1019 = vmatpush.xpose.msra.mxu0 0.0
        %1020 = vmatpush.xpose.msra.mxu0 0.0
        %1021 = vmatpush.xpose.msra.mxu0 0.0
        %1022 = vmatpush.xpose.msra.mxu0 0.0
        %1023 = vmatpush.xpose.msra.mxu0 0.0
        %1024 = vmatpush.xpose.msra.mxu0 0.0
        %1025 = vmatpush.xpose.msra.mxu0 0.0
        %1026 = vmatpush.xpose.msra.mxu0 0.0
        %1027 = vmatpush.xpose.msra.mxu0 0.0
        %1028 = vmatpush.xpose.msra.mxu0 0.0
        %1029 = vmatpush.xpose.msra.mxu0 0.0
        %1030 = vmatpush.xpose.msra.mxu0 %v400
        %1031 = vmatmul.f32.gmra.mxu0 %v301
        %v1032 = vpop.f32.mrf.mxu0
        %v1033 = vadd.f32 %v1013, %v1032
        %1034 = vdwg.mxu0
        %1035 = vmatpush.xpose.msra.mxu0 0.0
        %1036 = vmatpush.xpose.msra.mxu0 0.0
        %1037 = vmatpush.xpose.msra.mxu0 0.0
        %1038 = vmatpush.xpose.msra.mxu0 0.0
        %1039 = vmatpush.xpose.msra.mxu0 0.0
        %1040 = vmatpush.xpose.msra.mxu0 0.0
        %1041 = vmatpush.xpose.msra.mxu0 0.0
        %1042 = vmatpush.xpose.msra.mxu0 0.0
        %1043 = vmatpush.xpose.msra.mxu0 0.0
        %1044 = vmatpush.xpose.msra.mxu0 0.0
        %1045 = vmatpush.xpose.msra.mxu0 0.0
        %1046 = vmatpush.xpose.msra.mxu0 0.0
        %1047 = vmatpush.xpose.msra.mxu0 0.0
        %1048 = vmatpush.xpose.msra.mxu0 0.0
        %1049 = vmatpush.xpose.msra.mxu0 0.0
        %1050 = vmatpush.xpose.msra.mxu0 %v401
        %1051 = vmatmul.f32.gmra.mxu0 %v302
        %v1052 = vpop.f32.mrf.mxu0
        %v1053 = vadd.f32 %v1033, %v1052
        %1054 = vdwg.mxu0
        %1055 = vmatpush.xpose.msra.mxu0 0.0
        %1056 = vmatpush.xpose.msra.mxu0 0.0
        %1057 = vmatpush.xpose.msra.mxu0 0.0
        %1058 = vmatpush.xpose.msra.mxu0 0.0
        %1059 = vmatpush.xpose.msra.mxu0 0.0
        %1060 = vmatpush.xpose.msra.mxu0 0.0
        %1061 = vmatpush.xpose.msra.mxu0 0.0
        %1062 = vmatpush.xpose.msra.mxu0 0.0
        %1063 = vmatpush.xpose.msra.mxu0 0.0
        %1064 = vmatpush.xpose.msra.mxu0 0.0
        %1065 = vmatpush.xpose.msra.mxu0 0.0
        %1066 = vmatpush.xpose.msra.mxu0 0.0
        %1067 = vmatpush.xpose.msra.mxu0 0.0
        %1068 = vmatpush.xpose.msra.mxu0 0.0
        %1069 = vmatpush.xpose.msra.mxu0 0.0
        %1070 = vmatpush.xpose.msra.mxu0 %v402
        %1071 = vmatmul.f32.gmra.mxu0 %v303
        %v1072 = vpop.f32.mrf.mxu0
        %v1073 = vadd.f32 %v1053, %v1072
        %1074 = vdwg.mxu0
        %v1075 = vadd.f32 %v236, %v1073
        %vm1076 = vcmask 26624
        %1077 = vst.msk [vmem:[#allocation2] sm:$0x7] %vm1076, %v1075
        %v1078 = vld [vmem:[#allocation3] sm:$0x7]
        %1079 = vst [vmem:[#allocation1] ss:$2 sm:$0xff] %v204
        %s1080 = scalar_lea.vmem [#allocation1], 16
        %1081 = vst [vmem:[%s1080] ss:$2 sm:$0xff] %v205
        %s1082 = scalar_lea.vmem [#allocation1], 32
        %1083 = vst [vmem:[%s1082] ss:$2 sm:$0xff] %v206
        %s1084 = scalar_lea.vmem [#allocation1], 48
        %1085 = vst [vmem:[%s1084] ss:$2 sm:$0xff] %v207
        %v1086 = vld.sshfl [vmem:[#allocation1] sm:$0xff pattern:$0x75316420]
        %v1087 = vld.sshfl [vmem:[#allocation1 + $0x8] sm:$0xff pattern:$0x75316420]
        %v1088 = vld.sshfl [vmem:[#allocation1 + $0x10] sm:$0xff pattern:$0x75316420]
        %v1089 = vld.sshfl [vmem:[#allocation1 + $0x18] sm:$0xff pattern:$0x75316420]
        %v1090 = vld.sshfl [vmem:[#allocation1 + $0x20] sm:$0xff pattern:$0x75316420]
        %v1091 = vld.sshfl [vmem:[#allocation1 + $0x28] sm:$0xff pattern:$0x75316420]
        %v1092 = vld.sshfl [vmem:[#allocation1 + $0x30] sm:$0xff pattern:$0x75316420]
        %v1093 = vld.sshfl [vmem:[#allocation1 + $0x38] sm:$0xff pattern:$0x75316420]
        %1094 = vst [vmem:[#allocation1] ss:$2 sm:$0xff] %v208
        %1095 = vst [vmem:[%s1080] ss:$2 sm:$0xff] %v209
        %1096 = vst [vmem:[%s1082] ss:$2 sm:$0xff] %v210
        %1097 = vst [vmem:[%s1084] ss:$2 sm:$0xff] %v211
        %v1098 = vld.sshfl [vmem:[#allocation1] sm:$0xff pattern:$0x75316420]
        %v1099 = vld.sshfl [vmem:[#allocation1 + $0x8] sm:$0xff pattern:$0x75316420]
        %v1100 = vld.sshfl [vmem:[#allocation1 + $0x10] sm:$0xff pattern:$0x75316420]
        %v1101 = vld.sshfl [vmem:[#allocation1 + $0x18] sm:$0xff pattern:$0x75316420]
        %v1102 = vld.sshfl [vmem:[#allocation1 + $0x20] sm:$0xff pattern:$0x75316420]
        %v1103 = vld.sshfl [vmem:[#allocation1 + $0x28] sm:$0xff pattern:$0x75316420]
        %v1104 = vld.sshfl [vmem:[#allocation1 + $0x30] sm:$0xff pattern:$0x75316420]
        %v1105 = vld.sshfl [vmem:[#allocation1 + $0x38] sm:$0xff pattern:$0x75316420]
        %1106 = vst [vmem:[#allocation1] ss:$2 sm:$0xff] %v212
        %1107 = vst [vmem:[%s1080] ss:$2 sm:$0xff] %v213
        %1108 = vst [vmem:[%s1082] ss:$2 sm:$0xff] %v214
        %1109 = vst [vmem:[%s1084] ss:$2 sm:$0xff] %v215
        %v1110 = vld.sshfl [vmem:[#allocation1] sm:$0xff pattern:$0x75316420]
        %v1111 = vld.sshfl [vmem:[#allocation1 + $0x8] sm:$0xff pattern:$0x75316420]
        %v1112 = vld.sshfl [vmem:[#allocation1 + $0x10] sm:$0xff pattern:$0x75316420]
        %v1113 = vld.sshfl [vmem:[#allocation1 + $0x18] sm:$0xff pattern:$0x75316420]
        %v1114 = vld.sshfl [vmem:[#allocation1 + $0x20] sm:$0xff pattern:$0x75316420]
        %v1115 = vld.sshfl [vmem:[#allocation1 + $0x28] sm:$0xff pattern:$0x75316420]
        %v1116 = vld.sshfl [vmem:[#allocation1 + $0x30] sm:$0xff pattern:$0x75316420]
        %v1117 = vld.sshfl [vmem:[#allocation1 + $0x38] sm:$0xff pattern:$0x75316420]
        %1118 = vst [vmem:[#allocation1] ss:$2 sm:$0xff] %v216
        %1119 = vst [vmem:[%s1080] ss:$2 sm:$0xff] %v217
        %1120 = vst [vmem:[%s1082] ss:$2 sm:$0xff] %v218
        %1121 = vst [vmem:[%s1084] ss:$2 sm:$0xff] %v219
        %v1122 = vld.sshfl [vmem:[#allocation1] sm:$0xff pattern:$0x75316420]
        %v1123 = vld.sshfl [vmem:[#allocation1 + $0x8] sm:$0xff pattern:$0x75316420]
        %v1124 = vld.sshfl [vmem:[#allocation1 + $0x10] sm:$0xff pattern:$0x75316420]
        %v1125 = vld.sshfl [vmem:[#allocation1 + $0x18] sm:$0xff pattern:$0x75316420]
        %v1126 = vld.sshfl [vmem:[#allocation1 + $0x20] sm:$0xff pattern:$0x75316420]
        %v1127 = vld.sshfl [vmem:[#allocation1 + $0x28] sm:$0xff pattern:$0x75316420]
        %v1128 = vld.sshfl [vmem:[#allocation1 + $0x30] sm:$0xff pattern:$0x75316420]
        %v1129 = vld.sshfl [vmem:[#allocation1 + $0x38] sm:$0xff pattern:$0x75316420]
        %vm1162 = vcmask 1042432
        %v1163 = vsel %vm1162, %v1086, 0.0
        %v1164 = vsel %vm1162, %v1087, 0.0
        %v1165 = vadd.f32 %v1163, %v1164
        %v1166 = vsel %vm1162, %v1088, 0.0
        %v1167 = vadd.f32 %v1165, %v1166
        %v1168 = vsel %vm1162, %v1089, 0.0
        %v1169 = vadd.f32 %v1167, %v1168
        %v1170 = vsel %vm1162, %v1090, 0.0
        %v1171 = vadd.f32 %v1169, %v1170
        %v1172 = vsel %vm1162, %v1091, 0.0
        %v1173 = vadd.f32 %v1171, %v1172
        %v1174 = vsel %vm1162, %v1092, 0.0
        %v1175 = vadd.f32 %v1173, %v1174
        %v1176 = vsel %vm1162, %v1093, 0.0
        %v1177 = vadd.f32 %v1175, %v1176
        %v1178 = vsel %vm1162, %v1098, 0.0
        %v1179 = vadd.f32 %v1177, %v1178
        %v1180 = vsel %vm1162, %v1099, 0.0
        %v1181 = vadd.f32 %v1179, %v1180
        %v1182 = vsel %vm1162, %v1100, 0.0
        %v1183 = vadd.f32 %v1181, %v1182
        %v1184 = vsel %vm1162, %v1101, 0.0
        %v1185 = vadd.f32 %v1183, %v1184
        %v1186 = vsel %vm1162, %v1102, 0.0
        %v1187 = vadd.f32 %v1185, %v1186
        %v1188 = vsel %vm1162, %v1103, 0.0
        %v1189 = vadd.f32 %v1187, %v1188
        %v1190 = vsel %vm1162, %v1104, 0.0
        %v1191 = vadd.f32 %v1189, %v1190
        %v1192 = vsel %vm1162, %v1105, 0.0
        %v1193 = vadd.f32 %v1191, %v1192
        %v1194 = vsel %vm1162, %v1110, 0.0
        %v1195 = vadd.f32 %v1193, %v1194
        %v1196 = vsel %vm1162, %v1111, 0.0
        %v1197 = vadd.f32 %v1195, %v1196
        %v1198 = vsel %vm1162, %v1112, 0.0
        %v1199 = vadd.f32 %v1197, %v1198
        %v1200 = vsel %vm1162, %v1113, 0.0
        %v1201 = vadd.f32 %v1199, %v1200
        %v1202 = vsel %vm1162, %v1114, 0.0
        %v1203 = vadd.f32 %v1201, %v1202
        %v1204 = vsel %vm1162, %v1115, 0.0
        %v1205 = vadd.f32 %v1203, %v1204
        %v1206 = vsel %vm1162, %v1116, 0.0
        %v1207 = vadd.f32 %v1205, %v1206
        %v1208 = vsel %vm1162, %v1117, 0.0
        %v1209 = vadd.f32 %v1207, %v1208
        %v1210 = vsel %vm1162, %v1122, 0.0
        %v1211 = vadd.f32 %v1209, %v1210
        %v1212 = vsel %vm1162, %v1123, 0.0
        %v1213 = vadd.f32 %v1211, %v1212
        %v1214 = vsel %vm1162, %v1124, 0.0
        %v1215 = vadd.f32 %v1213, %v1214
        %v1216 = vsel %vm1162, %v1125, 0.0
        %v1217 = vadd.f32 %v1215, %v1216
        %v1218 = vsel %vm1162, %v1126, 0.0
        %v1219 = vadd.f32 %v1217, %v1218
        %v1220 = vsel %vm1162, %v1127, 0.0
        %v1221 = vadd.f32 %v1219, %v1220
        %v1222 = vsel %vm1162, %v1128, 0.0
        %v1223 = vadd.f32 %v1221, %v1222
        %v1224 = vsel %vm1162, %v1129, 0.0
        %v1225 = vadd.f32 %v1223, %v1224
        %1226 = vadd.xlane.f32.xlu0 %v1225
        %v1227 = vpop.xlane.xlu0 %1226
        %v1228 = vadd.f32 %v1078, %v1227
        %vm1229 = vcmask 2048
        %1230 = vst.msk [vmem:[#allocation3] sm:$0x7] %vm1229, %v1228
        %v1231 = vld [vmem:[#allocation4] sm:$0xf]
        %1232 = vst [vmem:[#allocation1] ss:$2 sm:$0xff] %v220
        %s1233 = scalar_lea.vmem [#allocation1], 16
        %1234 = vst [vmem:[%s1233] ss:$2 sm:$0xff] %v221
        %s1235 = scalar_lea.vmem [#allocation1], 32
        %1236 = vst [vmem:[%s1235] ss:$2 sm:$0xff] %v222
        %s1237 = scalar_lea.vmem [#allocation1], 48
        %1238 = vst [vmem:[%s1237] ss:$2 sm:$0xff] %v223
        %v1239 = vld.sshfl [vmem:[#allocation1] sm:$0xff pattern:$0x75316420]
        %v1240 = vld.sshfl [vmem:[#allocation1 + $0x8] sm:$0xff pattern:$0x75316420]
        %v1241 = vld.sshfl [vmem:[#allocation1 + $0x10] sm:$0xff pattern:$0x75316420]
        %v1242 = vld.sshfl [vmem:[#allocation1 + $0x18] sm:$0xff pattern:$0x75316420]
        %v1243 = vld.sshfl [vmem:[#allocation1 + $0x20] sm:$0xff pattern:$0x75316420]
        %v1244 = vld.sshfl [vmem:[#allocation1 + $0x28] sm:$0xff pattern:$0x75316420]
        %v1245 = vld.sshfl [vmem:[#allocation1 + $0x30] sm:$0xff pattern:$0x75316420]
        %v1246 = vld.sshfl [vmem:[#allocation1 + $0x38] sm:$0xff pattern:$0x75316420]
        %1247 = vst [vmem:[#allocation1] ss:$2 sm:$0xff] %v224
        %1248 = vst [vmem:[%s1233] ss:$2 sm:$0xff] %v225
        %1249 = vst [vmem:[%s1235] ss:$2 sm:$0xff] %v226
        %1250 = vst [vmem:[%s1237] ss:$2 sm:$0xff] %v227
        %v1251 = vld.sshfl [vmem:[#allocation1] sm:$0xff pattern:$0x75316420]
        %v1252 = vld.sshfl [vmem:[#allocation1 + $0x8] sm:$0xff pattern:$0x75316420]
        %v1253 = vld.sshfl [vmem:[#allocation1 + $0x10] sm:$0xff pattern:$0x75316420]
        %v1254 = vld.sshfl [vmem:[#allocation1 + $0x18] sm:$0xff pattern:$0x75316420]
        %v1255 = vld.sshfl [vmem:[#allocation1 + $0x20] sm:$0xff pattern:$0x75316420]
        %v1256 = vld.sshfl [vmem:[#allocation1 + $0x28] sm:$0xff pattern:$0x75316420]
        %v1257 = vld.sshfl [vmem:[#allocation1 + $0x30] sm:$0xff pattern:$0x75316420]
        %v1258 = vld.sshfl [vmem:[#allocation1 + $0x38] sm:$0xff pattern:$0x75316420]
        %1259 = vst [vmem:[#allocation1] ss:$2 sm:$0xff] %v228
        %1260 = vst [vmem:[%s1233] ss:$2 sm:$0xff] %v229
        %1261 = vst [vmem:[%s1235] ss:$2 sm:$0xff] %v230
        %1262 = vst [vmem:[%s1237] ss:$2 sm:$0xff] %v231
        %v1263 = vld.sshfl [vmem:[#allocation1] sm:$0xff pattern:$0x75316420]
        %v1264 = vld.sshfl [vmem:[#allocation1 + $0x8] sm:$0xff pattern:$0x75316420]
        %v1265 = vld.sshfl [vmem:[#allocation1 + $0x10] sm:$0xff pattern:$0x75316420]
        %v1266 = vld.sshfl [vmem:[#allocation1 + $0x18] sm:$0xff pattern:$0x75316420]
        %v1267 = vld.sshfl [vmem:[#allocation1 + $0x20] sm:$0xff pattern:$0x75316420]
        %v1268 = vld.sshfl [vmem:[#allocation1 + $0x28] sm:$0xff pattern:$0x75316420]
        %v1269 = vld.sshfl [vmem:[#allocation1 + $0x30] sm:$0xff pattern:$0x75316420]
        %v1270 = vld.sshfl [vmem:[#allocation1 + $0x38] sm:$0xff pattern:$0x75316420]
        %1271 = vst [vmem:[#allocation1] ss:$2 sm:$0xff] %v232
        %1272 = vst [vmem:[%s1233] ss:$2 sm:$0xff] %v233
        %1273 = vst [vmem:[%s1235] ss:$2 sm:$0xff] %v234
        %1274 = vst [vmem:[%s1237] ss:$2 sm:$0xff] %v235
        %v1275 = vld.sshfl [vmem:[#allocation1] sm:$0xff pattern:$0x75316420]
        %v1276 = vld.sshfl [vmem:[#allocation1 + $0x8] sm:$0xff pattern:$0x75316420]
        %v1277 = vld.sshfl [vmem:[#allocation1 + $0x10] sm:$0xff pattern:$0x75316420]
        %v1278 = vld.sshfl [vmem:[#allocation1 + $0x18] sm:$0xff pattern:$0x75316420]
        %v1279 = vld.sshfl [vmem:[#allocation1 + $0x20] sm:$0xff pattern:$0x75316420]
        %v1280 = vld.sshfl [vmem:[#allocation1 + $0x28] sm:$0xff pattern:$0x75316420]
        %v1281 = vld.sshfl [vmem:[#allocation1 + $0x30] sm:$0xff pattern:$0x75316420]
        %v1282 = vld.sshfl [vmem:[#allocation1 + $0x38] sm:$0xff pattern:$0x75316420]
        %vm1315 = vcmask 1043456
        %v1316 = vsel %vm1315, %v1239, 0.0
        %v1317 = vsel %vm1315, %v1240, 0.0
        %v1318 = vadd.f32 %v1316, %v1317
        %v1319 = vsel %vm1315, %v1241, 0.0
        %v1320 = vadd.f32 %v1318, %v1319
        %v1321 = vsel %vm1315, %v1242, 0.0
        %v1322 = vadd.f32 %v1320, %v1321
        %v1323 = vsel %vm1315, %v1243, 0.0
        %v1324 = vadd.f32 %v1322, %v1323
        %v1325 = vsel %vm1315, %v1244, 0.0
        %v1326 = vadd.f32 %v1324, %v1325
        %v1327 = vsel %vm1315, %v1245, 0.0
        %v1328 = vadd.f32 %v1326, %v1327
        %v1329 = vsel %vm1315, %v1246, 0.0
        %v1330 = vadd.f32 %v1328, %v1329
        %v1331 = vsel %vm1315, %v1251, 0.0
        %v1332 = vadd.f32 %v1330, %v1331
        %v1333 = vsel %vm1315, %v1252, 0.0
        %v1334 = vadd.f32 %v1332, %v1333
        %v1335 = vsel %vm1315, %v1253, 0.0
        %v1336 = vadd.f32 %v1334, %v1335
        %v1337 = vsel %vm1315, %v1254, 0.0
        %v1338 = vadd.f32 %v1336, %v1337
        %v1339 = vsel %vm1315, %v1255, 0.0
        %v1340 = vadd.f32 %v1338, %v1339
        %v1341 = vsel %vm1315, %v1256, 0.0
        %v1342 = vadd.f32 %v1340, %v1341
        %v1343 = vsel %vm1315, %v1257, 0.0
        %v1344 = vadd.f32 %v1342, %v1343
        %v1345 = vsel %vm1315, %v1258, 0.0
        %v1346 = vadd.f32 %v1344, %v1345
        %v1347 = vsel %vm1315, %v1263, 0.0
        %v1348 = vadd.f32 %v1346, %v1347
        %v1349 = vsel %vm1315, %v1264, 0.0
        %v1350 = vadd.f32 %v1348, %v1349
        %v1351 = vsel %vm1315, %v1265, 0.0
        %v1352 = vadd.f32 %v1350, %v1351
        %v1353 = vsel %vm1315, %v1266, 0.0
        %v1354 = vadd.f32 %v1352, %v1353
        %v1355 = vsel %vm1315, %v1267, 0.0
        %v1356 = vadd.f32 %v1354, %v1355
        %v1357 = vsel %vm1315, %v1268, 0.0
        %v1358 = vadd.f32 %v1356, %v1357
        %v1359 = vsel %vm1315, %v1269, 0.0
        %v1360 = vadd.f32 %v1358, %v1359
        %v1361 = vsel %vm1315, %v1270, 0.0
        %v1362 = vadd.f32 %v1360, %v1361
        %v1363 = vsel %vm1315, %v1275, 0.0
        %v1364 = vadd.f32 %v1362, %v1363
        %v1365 = vsel %vm1315, %v1276, 0.0
        %v1366 = vadd.f32 %v1364, %v1365
        %v1367 = vsel %vm1315, %v1277, 0.0
        %v1368 = vadd.f32 %v1366, %v1367
        %v1369 = vsel %vm1315, %v1278, 0.0
        %v1370 = vadd.f32 %v1368, %v1369
        %v1371 = vsel %vm1315, %v1279, 0.0
        %v1372 = vadd.f32 %v1370, %v1371
        %v1373 = vsel %vm1315, %v1280, 0.0
        %v1374 = vadd.f32 %v1372, %v1373
        %v1375 = vsel %vm1315, %v1281, 0.0
        %v1376 = vadd.f32 %v1374, %v1375
        %v1377 = vsel %vm1315, %v1282, 0.0
        %v1378 = vadd.f32 %v1376, %v1377
        %1379 = vadd.xlane.f32.xlu0 %v1378
        %v1380 = vpop.xlane.xlu0 %1379
        %v1381 = vadd.f32 %v1231, %v1380
        %vm1382 = vcmask 3072
        %1383 = vst.msk [vmem:[#allocation4] sm:$0xf] %vm1382, %v1381
        %v1384 = vld [vmem:[#allocation5] sm:$0x7]
        %v1385 = vmul.f32 %v204, %v204
        %v1386 = vmul.f32 %v205, %v205
        %v1387 = vmul.f32 %v206, %v206
        %v1388 = vmul.f32 %v207, %v207
        %v1389 = vmul.f32 %v208, %v208
        %v1390 = vmul.f32 %v209, %v209
        %v1391 = vmul.f32 %v210, %v210
        %v1392 = vmul.f32 %v211, %v211
        %v1393 = vmul.f32 %v212, %v212
        %v1394 = vmul.f32 %v213, %v213
        %v1395 = vmul.f32 %v214, %v214
        %v1396 = vmul.f32 %v215, %v215
        %v1397 = vmul.f32 %v216, %v216
        %v1398 = vmul.f32 %v217, %v217
        %v1399 = vmul.f32 %v218, %v218
        %v1400 = vmul.f32 %v219, %v219
        %1417 = vst [vmem:[#allocation1] ss:$2 sm:$0xff] %v1385
        %s1418 = scalar_lea.vmem [#allocation1], 16
        %1419 = vst [vmem:[%s1418] ss:$2 sm:$0xff] %v1386
        %s1420 = scalar_lea.vmem [#allocation1], 32
        %1421 = vst [vmem:[%s1420] ss:$2 sm:$0xff] %v1387
        %s1422 = scalar_lea.vmem [#allocation1], 48
        %1423 = vst [vmem:[%s1422] ss:$2 sm:$0xff] %v1388
        %v1424 = vld.sshfl [vmem:[#allocation1] sm:$0xff pattern:$0x75316420]
        %v1425 = vld.sshfl [vmem:[#allocation1 + $0x8] sm:$0xff pattern:$0x75316420]
        %v1426 = vld.sshfl [vmem:[#allocation1 + $0x10] sm:$0xff pattern:$0x75316420]
        %v1427 = vld.sshfl [vmem:[#allocation1 + $0x18] sm:$0xff pattern:$0x75316420]
        %v1428 = vld.sshfl [vmem:[#allocation1 + $0x20] sm:$0xff pattern:$0x75316420]
        %v1429 = vld.sshfl [vmem:[#allocation1 + $0x28] sm:$0xff pattern:$0x75316420]
        %v1430 = vld.sshfl [vmem:[#allocation1 + $0x30] sm:$0xff pattern:$0x75316420]
        %v1431 = vld.sshfl [vmem:[#allocation1 + $0x38] sm:$0xff pattern:$0x75316420]
        %1432 = vst [vmem:[#allocation1] ss:$2 sm:$0xff] %v1389
        %1433 = vst [vmem:[%s1418] ss:$2 sm:$0xff] %v1390
        %1434 = vst [vmem:[%s1420] ss:$2 sm:$0xff] %v1391
        %1435 = vst [vmem:[%s1422] ss:$2 sm:$0xff] %v1392
        %v1436 = vld.sshfl [vmem:[#allocation1] sm:$0xff pattern:$0x75316420]
        %v1437 = vld.sshfl [vmem:[#allocation1 + $0x8] sm:$0xff pattern:$0x75316420]
        %v1438 = vld.sshfl [vmem:[#allocation1 + $0x10] sm:$0xff pattern:$0x75316420]
        %v1439 = vld.sshfl [vmem:[#allocation1 + $0x18] sm:$0xff pattern:$0x75316420]
        %v1440 = vld.sshfl [vmem:[#allocation1 + $0x20] sm:$0xff pattern:$0x75316420]
        %v1441 = vld.sshfl [vmem:[#allocation1 + $0x28] sm:$0xff pattern:$0x75316420]
        %v1442 = vld.sshfl [vmem:[#allocation1 + $0x30] sm:$0xff pattern:$0x75316420]
        %v1443 = vld.sshfl [vmem:[#allocation1 + $0x38] sm:$0xff pattern:$0x75316420]
        %1444 = vst [vmem:[#allocation1] ss:$2 sm:$0xff] %v1393
        %1445 = vst [vmem:[%s1418] ss:$2 sm:$0xff] %v1394
        %1446 = vst [vmem:[%s1420] ss:$2 sm:$0xff] %v1395
        %1447 = vst [vmem:[%s1422] ss:$2 sm:$0xff] %v1396
        %v1448 = vld.sshfl [vmem:[#allocation1] sm:$0xff pattern:$0x75316420]
        %v1449 = vld.sshfl [vmem:[#allocation1 + $0x8] sm:$0xff pattern:$0x75316420]
        %v1450 = vld.sshfl [vmem:[#allocation1 + $0x10] sm:$0xff pattern:$0x75316420]
        %v1451 = vld.sshfl [vmem:[#allocation1 + $0x18] sm:$0xff pattern:$0x75316420]
        %v1452 = vld.sshfl [vmem:[#allocation1 + $0x20] sm:$0xff pattern:$0x75316420]
        %v1453 = vld.sshfl [vmem:[#allocation1 + $0x28] sm:$0xff pattern:$0x75316420]
        %v1454 = vld.sshfl [vmem:[#allocation1 + $0x30] sm:$0xff pattern:$0x75316420]
        %v1455 = vld.sshfl [vmem:[#allocation1 + $0x38] sm:$0xff pattern:$0x75316420]
        %1456 = vst [vmem:[#allocation1] ss:$2 sm:$0xff] %v1397
        %1457 = vst [vmem:[%s1418] ss:$2 sm:$0xff] %v1398
        %1458 = vst [vmem:[%s1420] ss:$2 sm:$0xff] %v1399
        %1459 = vst [vmem:[%s1422] ss:$2 sm:$0xff] %v1400
        %v1460 = vld.sshfl [vmem:[#allocation1] sm:$0xff pattern:$0x75316420]
        %v1461 = vld.sshfl [vmem:[#allocation1 + $0x8] sm:$0xff pattern:$0x75316420]
        %v1462 = vld.sshfl [vmem:[#allocation1 + $0x10] sm:$0xff pattern:$0x75316420]
        %v1463 = vld.sshfl [vmem:[#allocation1 + $0x18] sm:$0xff pattern:$0x75316420]
        %v1464 = vld.sshfl [vmem:[#allocation1 + $0x20] sm:$0xff pattern:$0x75316420]
        %v1465 = vld.sshfl [vmem:[#allocation1 + $0x28] sm:$0xff pattern:$0x75316420]
        %v1466 = vld.sshfl [vmem:[#allocation1 + $0x30] sm:$0xff pattern:$0x75316420]
        %v1467 = vld.sshfl [vmem:[#allocation1 + $0x38] sm:$0xff pattern:$0x75316420]
        %v1500 = vsel %vm1162, %v1424, 0.0
        %v1501 = vsel %vm1162, %v1425, 0.0
        %v1502 = vadd.f32 %v1500, %v1501
        %v1503 = vsel %vm1162, %v1426, 0.0
        %v1504 = vadd.f32 %v1502, %v1503
        %v1505 = vsel %vm1162, %v1427, 0.0
        %v1506 = vadd.f32 %v1504, %v1505
        %v1507 = vsel %vm1162, %v1428, 0.0
        %v1508 = vadd.f32 %v1506, %v1507
        %v1509 = vsel %vm1162, %v1429, 0.0
        %v1510 = vadd.f32 %v1508, %v1509
        %v1511 = vsel %vm1162, %v1430, 0.0
        %v1512 = vadd.f32 %v1510, %v1511
        %v1513 = vsel %vm1162, %v1431, 0.0
        %v1514 = vadd.f32 %v1512, %v1513
        %v1515 = vsel %vm1162, %v1436, 0.0
        %v1516 = vadd.f32 %v1514, %v1515
        %v1517 = vsel %vm1162, %v1437, 0.0
        %v1518 = vadd.f32 %v1516, %v1517
        %v1519 = vsel %vm1162, %v1438, 0.0
        %v1520 = vadd.f32 %v1518, %v1519
        %v1521 = vsel %vm1162, %v1439, 0.0
        %v1522 = vadd.f32 %v1520, %v1521
        %v1523 = vsel %vm1162, %v1440, 0.0
        %v1524 = vadd.f32 %v1522, %v1523
        %v1525 = vsel %vm1162, %v1441, 0.0
        %v1526 = vadd.f32 %v1524, %v1525
        %v1527 = vsel %vm1162, %v1442, 0.0
        %v1528 = vadd.f32 %v1526, %v1527
        %v1529 = vsel %vm1162, %v1443, 0.0
        %v1530 = vadd.f32 %v1528, %v1529
        %v1531 = vsel %vm1162, %v1448, 0.0
        %v1532 = vadd.f32 %v1530, %v1531
        %v1533 = vsel %vm1162, %v1449, 0.0
        %v1534 = vadd.f32 %v1532, %v1533
        %v1535 = vsel %vm1162, %v1450, 0.0
        %v1536 = vadd.f32 %v1534, %v1535
        %v1537 = vsel %vm1162, %v1451, 0.0
        %v1538 = vadd.f32 %v1536, %v1537
        %v1539 = vsel %vm1162, %v1452, 0.0
        %v1540 = vadd.f32 %v1538, %v1539
        %v1541 = vsel %vm1162, %v1453, 0.0
        %v1542 = vadd.f32 %v1540, %v1541
        %v1543 = vsel %vm1162, %v1454, 0.0
        %v1544 = vadd.f32 %v1542, %v1543
        %v1545 = vsel %vm1162, %v1455, 0.0
        %v1546 = vadd.f32 %v1544, %v1545
        %v1547 = vsel %vm1162, %v1460, 0.0
        %v1548 = vadd.f32 %v1546, %v1547
        %v1549 = vsel %vm1162, %v1461, 0.0
        %v1550 = vadd.f32 %v1548, %v1549
        %v1551 = vsel %vm1162, %v1462, 0.0
        %v1552 = vadd.f32 %v1550, %v1551
        %v1553 = vsel %vm1162, %v1463, 0.0
        %v1554 = vadd.f32 %v1552, %v1553
        %v1555 = vsel %vm1162, %v1464, 0.0
        %v1556 = vadd.f32 %v1554, %v1555
        %v1557 = vsel %vm1162, %v1465, 0.0
        %v1558 = vadd.f32 %v1556, %v1557
        %v1559 = vsel %vm1162, %v1466, 0.0
        %v1560 = vadd.f32 %v1558, %v1559
        %v1561 = vsel %vm1162, %v1467, 0.0
        %v1562 = vadd.f32 %v1560, %v1561
        %1563 = vadd.xlane.f32.xlu0 %v1562
        %v1564 = vpop.xlane.xlu0 %1563
        %v1565 = vadd.f32 %v1384, %v1564
        %1566 = vst.msk [vmem:[#allocation5] sm:$0x7] %vm1229, %v1565
        %v1567 = vld [vmem:[#allocation6] sm:$0xf]
        %v1568 = vmul.f32 %v220, %v220
        %v1569 = vmul.f32 %v221, %v221
        %v1570 = vmul.f32 %v222, %v222
        %v1571 = vmul.f32 %v223, %v223
        %v1572 = vmul.f32 %v224, %v224
        %v1573 = vmul.f32 %v225, %v225
        %v1574 = vmul.f32 %v226, %v226
        %v1575 = vmul.f32 %v227, %v227
        %v1576 = vmul.f32 %v228, %v228
        %v1577 = vmul.f32 %v229, %v229
        %v1578 = vmul.f32 %v230, %v230
        %v1579 = vmul.f32 %v231, %v231
        %v1580 = vmul.f32 %v232, %v232
        %v1581 = vmul.f32 %v233, %v233
        %v1582 = vmul.f32 %v234, %v234
        %v1583 = vmul.f32 %v235, %v235
        %1600 = vst [vmem:[#allocation1] ss:$2 sm:$0xff] %v1568
        %s1601 = scalar_lea.vmem [#allocation1], 16
        %1602 = vst [vmem:[%s1601] ss:$2 sm:$0xff] %v1569
        %s1603 = scalar_lea.vmem [#allocation1], 32
        %1604 = vst [vmem:[%s1603] ss:$2 sm:$0xff] %v1570
        %s1605 = scalar_lea.vmem [#allocation1], 48
        %1606 = vst [vmem:[%s1605] ss:$2 sm:$0xff] %v1571
        %v1607 = vld.sshfl [vmem:[#allocation1] sm:$0xff pattern:$0x75316420]
        %v1608 = vld.sshfl [vmem:[#allocation1 + $0x8] sm:$0xff pattern:$0x75316420]
        %v1609 = vld.sshfl [vmem:[#allocation1 + $0x10] sm:$0xff pattern:$0x75316420]
        %v1610 = vld.sshfl [vmem:[#allocation1 + $0x18] sm:$0xff pattern:$0x75316420]
        %v1611 = vld.sshfl [vmem:[#allocation1 + $0x20] sm:$0xff pattern:$0x75316420]
        %v1612 = vld.sshfl [vmem:[#allocation1 + $0x28] sm:$0xff pattern:$0x75316420]
        %v1613 = vld.sshfl [vmem:[#allocation1 + $0x30] sm:$0xff pattern:$0x75316420]
        %v1614 = vld.sshfl [vmem:[#allocation1 + $0x38] sm:$0xff pattern:$0x75316420]
        %1615 = vst [vmem:[#allocation1] ss:$2 sm:$0xff] %v1572
        %1616 = vst [vmem:[%s1601] ss:$2 sm:$0xff] %v1573
        %1617 = vst [vmem:[%s1603] ss:$2 sm:$0xff] %v1574
        %1618 = vst [vmem:[%s1605] ss:$2 sm:$0xff] %v1575
        %v1619 = vld.sshfl [vmem:[#allocation1] sm:$0xff pattern:$0x75316420]
        %v1620 = vld.sshfl [vmem:[#allocation1 + $0x8] sm:$0xff pattern:$0x75316420]
        %v1621 = vld.sshfl [vmem:[#allocation1 + $0x10] sm:$0xff pattern:$0x75316420]
        %v1622 = vld.sshfl [vmem:[#allocation1 + $0x18] sm:$0xff pattern:$0x75316420]
        %v1623 = vld.sshfl [vmem:[#allocation1 + $0x20] sm:$0xff pattern:$0x75316420]
        %v1624 = vld.sshfl [vmem:[#allocation1 + $0x28] sm:$0xff pattern:$0x75316420]
        %v1625 = vld.sshfl [vmem:[#allocation1 + $0x30] sm:$0xff pattern:$0x75316420]
        %v1626 = vld.sshfl [vmem:[#allocation1 + $0x38] sm:$0xff pattern:$0x75316420]
        %1627 = vst [vmem:[#allocation1] ss:$2 sm:$0xff] %v1576
        %1628 = vst [vmem:[%s1601] ss:$2 sm:$0xff] %v1577
        %1629 = vst [vmem:[%s1603] ss:$2 sm:$0xff] %v1578
        %1630 = vst [vmem:[%s1605] ss:$2 sm:$0xff] %v1579
        %v1631 = vld.sshfl [vmem:[#allocation1] sm:$0xff pattern:$0x75316420]
        %v1632 = vld.sshfl [vmem:[#allocation1 + $0x8] sm:$0xff pattern:$0x75316420]
        %v1633 = vld.sshfl [vmem:[#allocation1 + $0x10] sm:$0xff pattern:$0x75316420]
        %v1634 = vld.sshfl [vmem:[#allocation1 + $0x18] sm:$0xff pattern:$0x75316420]
        %v1635 = vld.sshfl [vmem:[#allocation1 + $0x20] sm:$0xff pattern:$0x75316420]
        %v1636 = vld.sshfl [vmem:[#allocation1 + $0x28] sm:$0xff pattern:$0x75316420]
        %v1637 = vld.sshfl [vmem:[#allocation1 + $0x30] sm:$0xff pattern:$0x75316420]
        %v1638 = vld.sshfl [vmem:[#allocation1 + $0x38] sm:$0xff pattern:$0x75316420]
        %1639 = vst [vmem:[#allocation1] ss:$2 sm:$0xff] %v1580
        %1640 = vst [vmem:[%s1601] ss:$2 sm:$0xff] %v1581
        %1641 = vst [vmem:[%s1603] ss:$2 sm:$0xff] %v1582
        %1642 = vst [vmem:[%s1605] ss:$2 sm:$0xff] %v1583
        %v1643 = vld.sshfl [vmem:[#allocation1] sm:$0xff pattern:$0x75316420]
        %v1644 = vld.sshfl [vmem:[#allocation1 + $0x8] sm:$0xff pattern:$0x75316420]
        %v1645 = vld.sshfl [vmem:[#allocation1 + $0x10] sm:$0xff pattern:$0x75316420]
        %v1646 = vld.sshfl [vmem:[#allocation1 + $0x18] sm:$0xff pattern:$0x75316420]
        %v1647 = vld.sshfl [vmem:[#allocation1 + $0x20] sm:$0xff pattern:$0x75316420]
        %v1648 = vld.sshfl [vmem:[#allocation1 + $0x28] sm:$0xff pattern:$0x75316420]
        %v1649 = vld.sshfl [vmem:[#allocation1 + $0x30] sm:$0xff pattern:$0x75316420]
        %v1650 = vld.sshfl [vmem:[#allocation1 + $0x38] sm:$0xff pattern:$0x75316420]
        %v1683 = vsel %vm1315, %v1607, 0.0
        %v1684 = vsel %vm1315, %v1608, 0.0
        %v1685 = vadd.f32 %v1683, %v1684
        %v1686 = vsel %vm1315, %v1609, 0.0
        %v1687 = vadd.f32 %v1685, %v1686
        %v1688 = vsel %vm1315, %v1610, 0.0
        %v1689 = vadd.f32 %v1687, %v1688
        %v1690 = vsel %vm1315, %v1611, 0.0
        %v1691 = vadd.f32 %v1689, %v1690
        %v1692 = vsel %vm1315, %v1612, 0.0
        %v1693 = vadd.f32 %v1691, %v1692
        %v1694 = vsel %vm1315, %v1613, 0.0
        %v1695 = vadd.f32 %v1693, %v1694
        %v1696 = vsel %vm1315, %v1614, 0.0
        %v1697 = vadd.f32 %v1695, %v1696
        %v1698 = vsel %vm1315, %v1619, 0.0
        %v1699 = vadd.f32 %v1697, %v1698
        %v1700 = vsel %vm1315, %v1620, 0.0
        %v1701 = vadd.f32 %v1699, %v1700
        %v1702 = vsel %vm1315, %v1621, 0.0
        %v1703 = vadd.f32 %v1701, %v1702
        %v1704 = vsel %vm1315, %v1622, 0.0
        %v1705 = vadd.f32 %v1703, %v1704
        %v1706 = vsel %vm1315, %v1623, 0.0
        %v1707 = vadd.f32 %v1705, %v1706
        %v1708 = vsel %vm1315, %v1624, 0.0
        %v1709 = vadd.f32 %v1707, %v1708
        %v1710 = vsel %vm1315, %v1625, 0.0
        %v1711 = vadd.f32 %v1709, %v1710
        %v1712 = vsel %vm1315, %v1626, 0.0
        %v1713 = vadd.f32 %v1711, %v1712
        %v1714 = vsel %vm1315, %v1631, 0.0
        %v1715 = vadd.f32 %v1713, %v1714
        %v1716 = vsel %vm1315, %v1632, 0.0
        %v1717 = vadd.f32 %v1715, %v1716
        %v1718 = vsel %vm1315, %v1633, 0.0
        %v1719 = vadd.f32 %v1717, %v1718
        %v1720 = vsel %vm1315, %v1634, 0.0
        %v1721 = vadd.f32 %v1719, %v1720
        %v1722 = vsel %vm1315, %v1635, 0.0
        %v1723 = vadd.f32 %v1721, %v1722
        %v1724 = vsel %vm1315, %v1636, 0.0
        %v1725 = vadd.f32 %v1723, %v1724
        %v1726 = vsel %vm1315, %v1637, 0.0
        %v1727 = vadd.f32 %v1725, %v1726
        %v1728 = vsel %vm1315, %v1638, 0.0
        %v1729 = vadd.f32 %v1727, %v1728
        %v1730 = vsel %vm1315, %v1643, 0.0
        %v1731 = vadd.f32 %v1729, %v1730
        %v1732 = vsel %vm1315, %v1644, 0.0
        %v1733 = vadd.f32 %v1731, %v1732
        %v1734 = vsel %vm1315, %v1645, 0.0
        %v1735 = vadd.f32 %v1733, %v1734
        %v1736 = vsel %vm1315, %v1646, 0.0
        %v1737 = vadd.f32 %v1735, %v1736
        %v1738 = vsel %vm1315, %v1647, 0.0
        %v1739 = vadd.f32 %v1737, %v1738
        %v1740 = vsel %vm1315, %v1648, 0.0
        %v1741 = vadd.f32 %v1739, %v1740
        %v1742 = vsel %vm1315, %v1649, 0.0
        %v1743 = vadd.f32 %v1741, %v1742
        %v1744 = vsel %vm1315, %v1650, 0.0
        %v1745 = vadd.f32 %v1743, %v1744
        %1746 = vadd.xlane.f32.xlu0 %v1745
        %v1747 = vpop.xlane.xlu0 %1746
        %v1748 = vadd.f32 %v1567, %v1747
        %1749 = vst.msk [vmem:[#allocation6] sm:$0xf] %vm1382, %v1748
        %p1750 = scmp.eq.s32.totalorder %s20, 3
        // Predicated region
        $region41: #{tpu_custom_call.1} parent=27 // pred_check
          %p1751 = pneg %p1750
        $region42: #{tpu_custom_call.1} parent=27 // pred_check_branch
          %1753 = sbr.rel (%p1751) target = $region44
        $region43: #{tpu_custom_call.1} parent=27 // pred_region
          %v1754 = vld [vmem:[#allocation3] sm:$0x7]
          %v1755 = vld [vmem:[#allocation4] sm:$0xf]
          %v1756 = vld [vmem:[#allocation2] sm:$0x7]
          %1757 = vxpose.xlu0.b32.start [1/16] %v1755, 128
          %1758 = vxpose.xlu0.b32.cont [2/16] 0.0, 128
          %1759 = vxpose.xlu0.b32.cont [3/16] 0.0, 128
          %1760 = vxpose.xlu0.b32.cont [4/16] 0.0, 128
          %1761 = vxpose.xlu0.b32.cont [5/16] 0.0, 128
          %1762 = vxpose.xlu0.b32.cont [6/16] 0.0, 128
          %1763 = vxpose.xlu0.b32.cont [7/16] 0.0, 128
          %1764 = vxpose.xlu0.b32.cont [8/16] 0.0, 128
          %1765 = vxpose.xlu0.b32.cont [9/16] 0.0, 128
          %1766 = vxpose.xlu0.b32.cont [10/16] 0.0, 128
          %1767 = vxpose.xlu0.b32.cont [11/16] 0.0, 128
          %1768 = vxpose.xlu0.b32.cont [12/16] 0.0, 128
          %1769 = vxpose.xlu0.b32.cont [13/16] 0.0, 128
          %1770 = vxpose.xlu0.b32.cont [14/16] 0.0, 128
          %1771 = vxpose.xlu0.b32.cont [15/16] 0.0, 128
          %1772 = vxpose.xlu0.b32.end [16/16] 0.0, 128
          %v1773 = vpop.trf.xlu0
          %v1774 = vpop.trf.xlu0
          %v1775 = vpop.trf.xlu0
          %v1776 = vpop.trf.xlu0
          %v1777 = vpop.trf.xlu0
          %v1778 = vpop.trf.xlu0
          %v1779 = vpop.trf.xlu0
          %v1780 = vpop.trf.xlu0
          %v1781 = vpop.trf.xlu0
          %v1782 = vpop.trf.xlu0
          %v1783 = vpop.trf.xlu0
          %v1784 = vpop.trf.xlu0
          %v1785 = vpop.trf.xlu0
          %v1786 = vpop.trf.xlu0
          %v1787 = vpop.trf.xlu0
          %v1788 = vpop.trf.xlu0
          %1790 = vset.pattern.permute.xlu0 0
          %1791 = vperm.xlu0 %1790, %v1754
          %v1792 = vpop.permute.xlu0 %1791
          %v1794 = vperm.slane %v1773, 0
          %v1795 = vmul.f32 %v1792, %v1794
          %v1796 = vmul.f32 %v1795, 6.25e-05
          %v1797 = vsub.f32 %v1756, %v1796
          %v1798 = vld [vmem:[#allocation5] sm:$0x7]
          %v1799 = vmul.f32 %v1754, %v1754
          %v1800 = vmul.f32 %v1799, 6.25e-05
          %v1801 = vsub.f32 %v1798, %v1800
          %v1802 = vld [vmem:[#allocation6] sm:$0xf]
          %v1803 = vmul.f32 %v1755, %v1755
          %v1804 = vmul.f32 %v1803, 6.25e-05
          %v1805 = vsub.f32 %v1802, %v1804
          %v1806 = vmax.f32 %v1805, 0.0
          %v1807 = vadd.f32 %v1806, 1e-08
          %v1808 = vmul.f32 %v1797, %v1797
          %1809 = vxpose.xlu0.b32.start [1/16] %v1807, 128
          %1810 = vxpose.xlu0.b32.cont [2/16] 0.0, 128
          %1811 = vxpose.xlu0.b32.cont [3/16] 0.0, 128
          %1812 = vxpose.xlu0.b32.cont [4/16] 0.0, 128
          %1813 = vxpose.xlu0.b32.cont [5/16] 0.0, 128
          %1814 = vxpose.xlu0.b32.cont [6/16] 0.0, 128
          %1815 = vxpose.xlu0.b32.cont [7/16] 0.0, 128
          %1816 = vxpose.xlu0.b32.cont [8/16] 0.0, 128
          %1817 = vxpose.xlu0.b32.cont [9/16] 0.0, 128
          %1818 = vxpose.xlu0.b32.cont [10/16] 0.0, 128
          %1819 = vxpose.xlu0.b32.cont [11/16] 0.0, 128
          %1820 = vxpose.xlu0.b32.cont [12/16] 0.0, 128
          %1821 = vxpose.xlu0.b32.cont [13/16] 0.0, 128
          %1822 = vxpose.xlu0.b32.cont [14/16] 0.0, 128
          %1823 = vxpose.xlu0.b32.cont [15/16] 0.0, 128
          %1824 = vxpose.xlu0.b32.end [16/16] 0.0, 128
          %v1825 = vpop.trf.xlu0
          %v1826 = vpop.trf.xlu0
          %v1827 = vpop.trf.xlu0
          %v1828 = vpop.trf.xlu0
          %v1829 = vpop.trf.xlu0
          %v1830 = vpop.trf.xlu0
          %v1831 = vpop.trf.xlu0
          %v1832 = vpop.trf.xlu0
          %v1833 = vpop.trf.xlu0
          %v1834 = vpop.trf.xlu0
          %v1835 = vpop.trf.xlu0
          %v1836 = vpop.trf.xlu0
          %v1837 = vpop.trf.xlu0
          %v1838 = vpop.trf.xlu0
          %v1839 = vpop.trf.xlu0
          %v1840 = vpop.trf.xlu0
          %v1841 = vperm.slane %v1825, 0
          %v1842 = vrcp.pop %v1841
          %v1843 = vmul.f32 %v1841, %v1842
          %v1844 = vsub.f32 1.0, %v1843
          %v1845 = vmul.f32 %v1842, %v1844
          %v1846 = vadd.f32 %v1842, %v1845
          %vm1847 = vweird.f32 %v1841
          %vm1848 = vweird.f32 %v1842
          %vm1849 = vmor %vm1847, %vm1848
          %v1850 = vsel %vm1849, %v1842, %v1846
          %v1851 = vand.u32 2147483647, %v1841
          %vm1852 = vcmp.eq.f32.partialorder %v1851, 8.507059e+37
          %v1853 = vand.u32 %v1841, 2147483648
          %v1854 = vor.u32 1.1754944e-38, %v1853
          %v1855 = vsel %vm1852, %v1854, %v1850
          %v1856 = vmul.f32 %v1808, %v1855
          %1858 = vset.pattern.permute.xlu0 0
          %1859 = vperm.xlu0 %1858, %v1801
          %v1860 = vpop.permute.xlu0 %1859
          %v1862 = vsub.f32 %v1860, %v1856
          %v1863 = vmax.f32 %v1862, 0.0
          %v1864 = vadd.f32 %v1863, 1e-08
          %v1865 = vrcp.pop %v1864
          %v1866 = vmul.f32 %v1864, %v1865
          %v1867 = vsub.f32 1.0, %v1866
          %v1868 = vmul.f32 %v1865, %v1867
          %v1869 = vadd.f32 %v1865, %v1868
          %vm1870 = vweird.f32 %v1864
          %vm1871 = vweird.f32 %v1865
          %vm1872 = vmor %vm1870, %vm1871
          %v1873 = vsel %vm1872, %v1865, %v1869
          %v1874 = vand.u32 2147483647, %v1864
          %vm1875 = vcmp.eq.f32.partialorder %v1874, 8.507059e+37
          %v1876 = vand.u32 %v1864, 2147483648
          %v1877 = vor.u32 1.1754944e-38, %v1876
          %v1878 = vsel %vm1875, %v1877, %v1873
          %v1879 = vmul.f32 %v1856, %v1878
          %v1880 = vadd.f32 %v1879, 1e-08
          %v1881 = vlog2.pop %v1880
          %v1882 = vmul.f32 %v1881, 0.6931472
          %v1883 = vmul.f32 %v1882, 0.4342945
          %v1884 = vmul.f32 %v1883, -10.0
          %1885 = vst.msk [vmem:[#allocation12] sm:$0x7] %vm1076, %v1884
        $region44: #{tpu_custom_call.1} parent=27 // pred_fallthru
          _
        // Predicated region
        $region45: #{tpu_custom_call.1} parent=27 // pred_check
          %p1886 = pneg %p85
        $region46: #{tpu_custom_call.1} parent=27 // pred_check_branch
          %1888 = sbr.rel (%p1886) target = $region48
        $region47: #{tpu_custom_call.1} parent=27 // pred_region
          %1890 = vsyncadd [#allocation9], 0
          %s1892 = sshll.u32 [#allocation12], 4
          %s1893 = int_to_ptr.vmem [resolvable:$true] %s1892
          %s1894 = sshll.u32 %s2, 4
          %s1895 = int_to_ptr.hbm [resolvable:$true] %s1894
          %1897 = dma.vmem_to_hbm [thread:$0]  %s1893, 64, %s1895, [#allocation9]
        $region48: #{tpu_custom_call.1} parent=27 // pred_fallthru
          _
        // Predicated region
        $region49: #{tpu_custom_call.1} parent=27 // pred_check
          %p1898 = pneg %p85
        $region50: #{tpu_custom_call.1} parent=27 // pred_check_branch
          %1900 = sbr.rel (%p1898) target = $region52
        $region51: #{tpu_custom_call.1} parent=27 // pred_region
          %1902 = dma.done [#allocation9], 64
        $region52: #{tpu_custom_call.1} parent=27 // pred_fallthru
          _
      $region28: #{tpu_custom_call.1} parent=5 // pred_fallthru
        _
      %p1903 = scmp.le.s32.totalorder 2, %s15
      // Predicated region
      $region53: #{tpu_custom_call.1} parent=5 // pred_check
        %p1904 = pneg %p1903
      $region54: #{tpu_custom_call.1} parent=5 // pred_check_branch
        %1906 = sbr.rel (%p1904) target = $region56
      $region55: #{tpu_custom_call.1} parent=5 // pred_region
        %s1907 = ssub.s32 %s15, 2
      $region56: #{tpu_custom_call.1} parent=5 // pred_fallthru
        _
    $region6: #{tpu_custom_call.1} parent=1 // loop_footer
      %s19 = sadd.s32 1, %s15
    $region7: #{tpu_custom_call.1} parent=1 // loop_footer_branch
      %14 = sbr.rel target = $region3
    $region8: #{tpu_custom_call.1} parent=1 // loop_exit
      _
    %1908 = vsyncpa [#allocation8], 1
    %s1909 = scalar_lea.sflag [#allocation8], 1
    %1910 = vsyncpa %s1909, 1
    %1911 = vsyncpa [#allocation11], 1
    %s1912 = scalar_lea.sflag [#allocation11], 1
    %1913 = vsyncpa %s1912, 1
    %1914 = vsyncpa [#allocation9], 1
    %s1915 = scalar_lea.sflag [#allocation9], 1
    %1916 = vsyncpa %s1915, 1

</llo_original>
